<compile_context>
chip_gen: v5e
topology: v5e:2x2
jax: 0.10.0
libtpu: 0.0.40
codegen_flags: <defaults>
</compile_context>

<pallas_src>
import functools

import jax
import jax.numpy as jnp
from jax.experimental import pallas as pl
from jax.experimental.pallas import tpu as pltpu


# ----------------------------- kernel helpers -----------------------------

def _layernorm(x, gamma, beta, eps=1e-5):
    mu = jnp.mean(x, axis=-1, keepdims=True)
    xc = x - mu
    var = jnp.mean(xc * xc, axis=-1, keepdims=True)
    return xc * jax.lax.rsqrt(var + eps) * gamma + beta


def _leaky_relu(x, slope=0.1):
    # single VALU max instead of compare+select
    return jnp.maximum(x, slope * x)


def _mm(x, w_ref):
    # bf16 x bf16 -> f32 accumulate on the MXU
    return jnp.dot(x.astype(w_ref.dtype), w_ref[...],
                   preferred_element_type=jnp.float32)


# ------------------------------- the kernel -------------------------------

def dueling_dqn_kernel(
    action_space,
    x_ref,
    p0_ref,                 # [2, S]      rows: (gamma0, beta0) input LayerNorm
    w1_ref, v1_ref,         # [S,512]bf16, [3,512] rows: (bias, gamma, beta)
    w2_ref, v2_ref,         # [512,256],   [3,256]
    w3_ref, v3_ref,         # [256,128],   [3,128]
    wbr_ref, bbr_ref,       # fused [128,192] = [advantage_stream|value_stream], [1,192]
    va_ref,                 # [2,128]     rows: (gamma_a, beta_a)   advantage_ln
    vv_ref,                 # [3,64]      rows: (gamma_v, beta_v, value-head weight row)
    wa2_ref, ba2_ref,       # advantage head, lane-padded to a_pad (>=128)
    bv2_ref,                # [1,1]       value head bias
    q_ref,
):
    # input layer norm (f32)
    x = _layernorm(x_ref[...], p0_ref[0:1, :], p0_ref[1:2, :])

    # trunk: fc -> LN -> leaky_relu  (dropout = identity at inference)
    def trunk(h, w_ref, v_ref):
        y = _mm(h, w_ref) + v_ref[0:1, :]
        return _leaky_relu(_layernorm(y, v_ref[1:2, :], v_ref[2:3, :]))

    h = trunk(x, w1_ref, v1_ref)
    h = trunk(h, w2_ref, v2_ref)
    h = trunk(h, w3_ref, v3_ref)

    # fused branch matmul: [TB,128] @ [128, 128+64] -> [adv_pre | val_pre]
    y = _mm(h, wbr_ref) + bbr_ref[...]
    na = va_ref.shape[-1]               # 128 (advantage stream width)
    a_pre = y[:, :na]
    v_pre = y[:, na:]

    a = _leaky_relu(_layernorm(a_pre, va_ref[0:1, :], va_ref[1:2, :]))
    v = _leaky_relu(_layernorm(v_pre, vv_ref[0:1, :], vv_ref[1:2, :]))

    # value head (N=1): broadcast-mul + lane reduce on VPU/XLU instead of MXU
    value = jnp.sum(v * vv_ref[2:3, :], axis=-1, keepdims=True) + bv2_ref[...]

    # advantage head, lane-padded to a_pad output columns
    advantage = _mm(a, wa2_ref) + ba2_ref[...]        # [TB, A_PAD]

    # pack_params guarantees padded wa2/ba2 columns are EXACTLY zero, so a
    # plain lane sum equals the masked sum over the true action columns.
    adv_mean = jnp.sum(advantage, axis=-1, keepdims=True) * (1.0 / action_space)

    q_ref[...] = value + (advantage - adv_mean)


# ------------------------------ wrapper / init -----------------------------

def _round_up(x, m):
    return (x + m - 1) // m * m


def _a_pad(action_space):
    return max(128, _round_up(action_space, 128))


def _xavier_uniform(key, fan_in, fan_out):
    bound = jnp.sqrt(6.0 / (fan_in + fan_out))
    # stored as [in, out] so kernel can do x @ W
    return jax.random.uniform(key, (fan_in, fan_out), jnp.float32,
                              minval=-bound, maxval=bound)


def init_params(key, state_size, action_space):
    ks = jax.random.split(key, 7)
    p = {}
    p["g0"] = jnp.ones((1, state_size), jnp.float32)
    p["b0"] = jnp.zeros((1, state_size), jnp.float32)
    p["w1"] = _xavier_uniform(ks[0], state_size, 512)
    p["bb1"] = jnp.zeros((1, 512), jnp.float32)
    p["g1"] = jnp.ones((1, 512), jnp.float32)
    p["be1"] = jnp.zeros((1, 512), jnp.float32)
    p["w2"] = _xavier_uniform(ks[1], 512, 256)
    p["bb2"] = jnp.zeros((1, 256), jnp.float32)
    p["g2"] = jnp.ones((1, 256), jnp.float32)
    p["be2"] = jnp.zeros((1, 256), jnp.float32)
    p["w3"] = _xavier_uniform(ks[2], 256, 128)
    p["bb3"] = jnp.zeros((1, 128), jnp.float32)
    p["g3"] = jnp.ones((1, 128), jnp.float32)
    p["be3"] = jnp.zeros((1, 128), jnp.float32)
    p["wv1"] = _xavier_uniform(ks[3], 128, 64)
    p["bv1"] = jnp.zeros((1, 64), jnp.float32)
    p["gv"] = jnp.ones((1, 64), jnp.float32)
    p["bev"] = jnp.zeros((1, 64), jnp.float32)
    p["wv2"] = _xavier_uniform(ks[4], 64, 1)
    p["bv2"] = jnp.zeros((1, 1), jnp.float32)
    p["wa1"] = _xavier_uniform(ks[5], 128, 128)
    p["ba1"] = jnp.zeros((1, 128), jnp.float32)
    p["ga"] = jnp.ones((1, 128), jnp.float32)
    p["bea"] = jnp.zeros((1, 128), jnp.float32)
    p["wa2"] = _xavier_uniform(ks[6], 128, action_space)
    p["ba2"] = jnp.zeros((1, action_space), jnp.float32)
    return p


def pack_params(p, action_space):
    """Cast matmul weights to bf16, fuse branch weights, pack per-layer vectors.

    Invariant: the padded columns of wa2/ba2 are EXACTLY zero -- the kernel's
    advantage-mean relies on this (no in-kernel column mask).
    """
    bf = jnp.bfloat16
    a_pad = _a_pad(action_space)
    wa2_pad = jnp.zeros((128, a_pad), jnp.float32).at[:, :action_space].set(p["wa2"])
    ba2_pad = jnp.zeros((1, a_pad), jnp.float32).at[:, :action_space].set(p["ba2"])
    return {
        "p0": jnp.concatenate([p["g0"], p["b0"]], axis=0),
        "w1": p["w1"].astype(bf),
        "v1": jnp.concatenate([p["bb1"], p["g1"], p["be1"]], axis=0),
        "w2": p["w2"].astype(bf),
        "v2": jnp.concatenate([p["bb2"], p["g2"], p["be2"]], axis=0),
        "w3": p["w3"].astype(bf),
        "v3": jnp.concatenate([p["bb3"], p["g3"], p["be3"]], axis=0),
        # advantage stream first (lane-aligned 128 slice), value stream second (64)
        "wbr": jnp.concatenate([p["wa1"], p["wv1"]], axis=1).astype(bf),
        "bbr": jnp.concatenate([p["ba1"], p["bv1"]], axis=1),
        "va": jnp.concatenate([p["ga"], p["bea"]], axis=0),
        "vv": jnp.concatenate([p["gv"], p["bev"], p["wv2"].T], axis=0),
        "wa2": wa2_pad.astype(bf),
        "ba2": ba2_pad,
        "bv2": p["bv2"],
    }


_KERNEL_ORDER = [
    "p0",
    "w1", "v1",
    "w2", "v2",
    "w3", "v3",
    "wbr", "bbr",
    "va", "vv",
    "wa2", "ba2",
    "bv2",
]


@functools.partial(jax.jit, static_argnames=("action_space", "block_b"))
def dueling_dqn_forward(x, packed, *, action_space, block_b=1024):
    B, S = x.shape
    a_pad = _a_pad(action_space)

    # Batch tile: multiple of 16 sublanes (bf16 LHS packing), up to block_b
    # rows.  For batches >= 32 the tile is chosen so the grid has >= 2 steps,
    # keeping both v7x TensorCores busy (harmless on single-TC v5e/v6e).
    B16 = _round_up(B, 16)
    TB = min(block_b, max(16, _round_up(pl.cdiv(B16, 2), 16)))
    Bp = _round_up(B, TB)
    if Bp != B:
        x = jnp.pad(x, ((0, Bp - B), (0, 0)))

    args = [x] + [packed[k] for k in _KERNEL_ORDER]

    x_spec = pl.BlockSpec((TB, S), lambda i: (i, 0))
    # params: full-array blocks, constant index -> VMEM-resident across steps
    param_specs = [pl.BlockSpec(packed[k].shape, lambda i: (0, 0))
                   for k in _KERNEL_ORDER]
    out_spec = pl.BlockSpec((TB, a_pad), lambda i: (i, 0))

    q_full = pl.pallas_call(
        functools.partial(dueling_dqn_kernel, action_space),
        out_shape=jax.ShapeDtypeStruct((Bp, a_pad), jnp.float32),
        grid=(Bp // TB,),
        in_specs=[x_spec] + param_specs,
        out_specs=out_spec,
        compiler_params=pltpu.CompilerParams(
            dimension_semantics=("parallel",),
            # above all scoped defaults, below v7x's 64 MiB physical VMEM;
            # at TB<=1024 the live footprint is <~6 MiB so this is ample.
            vmem_limit_bytes=48 << 20,
        ),
    )(*args)

    return q_full[:B, :action_space]


# ------------------------------ reference (JAX) -----------------------------

def reference_forward(x, p, *, matmul_dtype=jnp.float32):
    def ln(z, g, b):
        mu = z.mean(-1, keepdims=True)
        var = ((z - mu) ** 2).mean(-1, keepdims=True)
        return (z - mu) * jax.lax.rsqrt(var + 1e-5) * g + b

    def lrelu(z):
        return jnp.maximum(z, 0.1 * z)

    def mm(z, w):
        return jnp.dot(z.astype(matmul_dtype), w.astype(matmul_dtype),
                       preferred_element_type=jnp.float32)

    x = ln(x, p["g0"], p["b0"])
    h = lrelu(ln(mm(x, p["w1"]) + p["bb1"], p["g1"], p["be1"]))
    h = lrelu(ln(mm(h, p["w2"]) + p["bb2"], p["g2"], p["be2"]))
    h = lrelu(ln(mm(h, p["w3"]) + p["bb3"], p["g3"], p["be3"]))
    v = lrelu(ln(mm(h, p["wv1"]) + p["bv1"], p["gv"], p["bev"]))
    value = v @ p["wv2"] + p["bv2"]          # f32 head, mirrors the kernel
    a = lrelu(ln(mm(h, p["wa1"]) + p["ba1"], p["ga"], p["bea"]))
    adv = mm(a, p["wa2"]) + p["ba2"]
    return value + (adv - adv.mean(-1, keepdims=True))


# ----------------------------------- main -----------------------------------

if __name__ == "__main__":
    STATE_SIZE = 32
    ACTION_SPACE = 4
    BATCH = 2

    key = jax.random.PRNGKey(0)
    k_x, k_p = jax.random.split(key)
    x = jax.random.normal(k_x, (BATCH, STATE_SIZE), jnp.float32)
    params = init_params(k_p, STATE_SIZE, ACTION_SPACE)
    packed = pack_params(params, ACTION_SPACE)

    q = dueling_dqn_forward(x, packed, action_space=ACTION_SPACE)
    q = jax.block_until_ready(q)
    assert q.shape == (BATCH, ACTION_SPACE)

    # compare against a reference that mimics the kernel's bf16-matmul / f32-LN
    # precision (bf16 weights need relaxed tolerance vs a pure-f32 reference)
    q_ref = reference_forward(x, params, matmul_dtype=jnp.bfloat16)
    assert jnp.allclose(q, q_ref, atol=2e-2, rtol=2e-2), (q, q_ref)

    print("KERNEL_OK")
</pallas_src>

<mosaic_0001>
module attributes {stable_mosaic.version = 11 : i64} {
  func.func @dueling_dqn_kernel(%arg0: i32, %arg1: memref<16x32xf32, #tpu.memory_space<vmem>>, %arg2: memref<2x32xf32, #tpu.memory_space<vmem>>, %arg3: memref<32x512xbf16, #tpu.memory_space<vmem>>, %arg4: memref<3x512xf32, #tpu.memory_space<vmem>>, %arg5: memref<512x256xbf16, #tpu.memory_space<vmem>>, %arg6: memref<3x256xf32, #tpu.memory_space<vmem>>, %arg7: memref<256x128xbf16, #tpu.memory_space<vmem>>, %arg8: memref<3x128xf32, #tpu.memory_space<vmem>>, %arg9: memref<128x192xbf16, #tpu.memory_space<vmem>>, %arg10: memref<1x192xf32, #tpu.memory_space<vmem>>, %arg11: memref<2x128xf32, #tpu.memory_space<vmem>>, %arg12: memref<3x64xf32, #tpu.memory_space<vmem>>, %arg13: memref<128x128xbf16, #tpu.memory_space<vmem>>, %arg14: memref<1x128xf32, #tpu.memory_space<vmem>>, %arg15: memref<1x1xf32, #tpu.memory_space<vmem>>, %arg16: memref<16x128xf32, #tpu.memory_space<vmem>>) attributes {dimension_semantics = [#tpu.dimension_semantics<parallel>], iteration_bounds = array<i64: 1>, scalar_prefetch = 0 : i64, scratch_operands = 0 : i64, tpu.core_type = #tpu.core_type<tc>, window_params = [{transform_indices = @transform_0, window_bounds = array<i64: 16, 32>}, {pipeline_mode = #tpu.pipeline_mode<synchronous>, transform_indices = @transform_1, window_bounds = array<i64: 2, 32>}, {pipeline_mode = #tpu.pipeline_mode<synchronous>, transform_indices = @transform_2, window_bounds = array<i64: 32, 512>}, {pipeline_mode = #tpu.pipeline_mode<synchronous>, transform_indices = @transform_3, window_bounds = array<i64: 3, 512>}, {pipeline_mode = #tpu.pipeline_mode<synchronous>, transform_indices = @transform_4, window_bounds = array<i64: 512, 256>}, {pipeline_mode = #tpu.pipeline_mode<synchronous>, transform_indices = @transform_5, window_bounds = array<i64: 3, 256>}, {pipeline_mode = #tpu.pipeline_mode<synchronous>, transform_indices = @transform_6, window_bounds = array<i64: 256, 128>}, {pipeline_mode = #tpu.pipeline_mode<synchronous>, transform_indices = @transform_7, window_bounds = array<i64: 3, 128>}, {pipeline_mode = #tpu.pipeline_mode<synchronous>, transform_indices = @transform_8, window_bounds = array<i64: 128, 192>}, {pipeline_mode = #tpu.pipeline_mode<synchronous>, transform_indices = @transform_9, window_bounds = array<i64: 1, 192>}, {pipeline_mode = #tpu.pipeline_mode<synchronous>, transform_indices = @transform_10, window_bounds = array<i64: 2, 128>}, {pipeline_mode = #tpu.pipeline_mode<synchronous>, transform_indices = @transform_11, window_bounds = array<i64: 3, 64>}, {pipeline_mode = #tpu.pipeline_mode<synchronous>, transform_indices = @transform_12, window_bounds = array<i64: 128, 128>}, {pipeline_mode = #tpu.pipeline_mode<synchronous>, transform_indices = @transform_13, window_bounds = array<i64: 1, 128>}, {pipeline_mode = #tpu.pipeline_mode<synchronous>, transform_indices = @transform_14, window_bounds = array<i64: 1, 1>}, {transform_indices = @transform_15, window_bounds = array<i64: 16, 128>}]} {
    %c0 = arith.constant 0 : index
    %c0_0 = arith.constant 0 : index
    %0 = vector.load %arg1[%c0, %c0_0] : memref<16x32xf32, #tpu.memory_space<vmem>>, vector<16x32xf32>
    %c0_1 = arith.constant 0 : index
    %c0_2 = arith.constant 0 : index
    %1 = vector.load %arg2[%c0_1, %c0_2] : memref<2x32xf32, #tpu.memory_space<vmem>>, vector<1x32xf32>
    %c1 = arith.constant 1 : index
    %c0_3 = arith.constant 0 : index
    %2 = vector.load %arg2[%c1, %c0_3] : memref<2x32xf32, #tpu.memory_space<vmem>>, vector<1x32xf32>
    %cst = arith.constant dense<0.000000e+00> : vector<16xf32>
    %3 = vector.multi_reduction <add>, %0, %cst [1] : vector<16x32xf32> to vector<16xf32>
    %4 = vector.shape_cast %3 : vector<16xf32> to vector<16x1xf32>
    %cst_4 = arith.constant 3.200000e+01 : f32
    %5 = vector.broadcast %cst_4 : f32 to vector<16x1xf32>
    %6 = arith.divf %4, %5 : vector<16x1xf32>
    %7 = vector.broadcast %6 : vector<16x1xf32> to vector<16x32xf32>
    %8 = arith.subf %0, %7 : vector<16x32xf32>
    %9 = arith.mulf %8, %8 : vector<16x32xf32>
    %cst_5 = arith.constant dense<0.000000e+00> : vector<16xf32>
    %10 = vector.multi_reduction <add>, %9, %cst_5 [1] : vector<16x32xf32> to vector<16xf32>
    %11 = vector.shape_cast %10 : vector<16xf32> to vector<16x1xf32>
    %cst_6 = arith.constant 3.200000e+01 : f32
    %12 = vector.broadcast %cst_6 : f32 to vector<16x1xf32>
    %13 = arith.divf %11, %12 : vector<16x1xf32>
    %cst_7 = arith.constant 9.99999974E-6 : f32
    %14 = vector.broadcast %cst_7 : f32 to vector<16x1xf32>
    %15 = arith.addf %13, %14 : vector<16x1xf32>
    %16 = math.rsqrt %15 : vector<16x1xf32>
    %17 = vector.broadcast %16 : vector<16x1xf32> to vector<16x32xf32>
    %18 = arith.mulf %8, %17 : vector<16x32xf32>
    %19 = vector.broadcast %1 : vector<1x32xf32> to vector<16x32xf32>
    %20 = arith.mulf %18, %19 : vector<16x32xf32>
    %21 = vector.broadcast %2 : vector<1x32xf32> to vector<16x32xf32>
    %22 = arith.addf %20, %21 : vector<16x32xf32>
    %23 = arith.truncf %22 : vector<16x32xf32> to vector<16x32xbf16>
    %c0_8 = arith.constant 0 : index
    %c0_9 = arith.constant 0 : index
    %24 = vector.load %arg3[%c0_8, %c0_9] : memref<32x512xbf16, #tpu.memory_space<vmem>>, vector<32x512xbf16>
    %cst_10 = arith.constant dense<0.000000e+00> : vector<16x512xf32>
    %25 = tpu.matmul %23, %24, %cst_10 {dimension_numbers = #tpu.dot_dimension_numbers<[1], [0], [0], [1], [0, 0, 1, 1], [], []>} : vector<16x32xbf16>, vector<32x512xbf16>, vector<16x512xf32> -> vector<16x512xf32>
    %c0_11 = arith.constant 0 : index
    %c0_12 = arith.constant 0 : index
    %26 = vector.load %arg4[%c0_11, %c0_12] : memref<3x512xf32, #tpu.memory_space<vmem>>, vector<1x512xf32>
    %27 = vector.broadcast %26 : vector<1x512xf32> to vector<16x512xf32>
    %28 = arith.addf %25, %27 : vector<16x512xf32>
    %c1_13 = arith.constant 1 : index
    %c0_14 = arith.constant 0 : index
    %29 = vector.load %arg4[%c1_13, %c0_14] : memref<3x512xf32, #tpu.memory_space<vmem>>, vector<1x512xf32>
    %c2 = arith.constant 2 : index
    %c0_15 = arith.constant 0 : index
    %30 = vector.load %arg4[%c2, %c0_15] : memref<3x512xf32, #tpu.memory_space<vmem>>, vector<1x512xf32>
    %cst_16 = arith.constant dense<0.000000e+00> : vector<16xf32>
    %31 = vector.multi_reduction <add>, %28, %cst_16 [1] : vector<16x512xf32> to vector<16xf32>
    %32 = vector.shape_cast %31 : vector<16xf32> to vector<16x1xf32>
    %cst_17 = arith.constant 5.120000e+02 : f32
    %33 = vector.broadcast %cst_17 : f32 to vector<16x1xf32>
    %34 = arith.divf %32, %33 : vector<16x1xf32>
    %35 = vector.broadcast %34 : vector<16x1xf32> to vector<16x512xf32>
    %36 = arith.subf %28, %35 : vector<16x512xf32>
    %37 = arith.mulf %36, %36 : vector<16x512xf32>
    %cst_18 = arith.constant dense<0.000000e+00> : vector<16xf32>
    %38 = vector.multi_reduction <add>, %37, %cst_18 [1] : vector<16x512xf32> to vector<16xf32>
    %39 = vector.shape_cast %38 : vector<16xf32> to vector<16x1xf32>
    %cst_19 = arith.constant 5.120000e+02 : f32
    %40 = vector.broadcast %cst_19 : f32 to vector<16x1xf32>
    %41 = arith.divf %39, %40 : vector<16x1xf32>
    %cst_20 = arith.constant 9.99999974E-6 : f32
    %42 = vector.broadcast %cst_20 : f32 to vector<16x1xf32>
    %43 = arith.addf %41, %42 : vector<16x1xf32>
    %44 = math.rsqrt %43 : vector<16x1xf32>
    %45 = vector.broadcast %44 : vector<16x1xf32> to vector<16x512xf32>
    %46 = arith.mulf %36, %45 : vector<16x512xf32>
    %47 = vector.broadcast %29 : vector<1x512xf32> to vector<16x512xf32>
    %48 = arith.mulf %46, %47 : vector<16x512xf32>
    %49 = vector.broadcast %30 : vector<1x512xf32> to vector<16x512xf32>
    %50 = arith.addf %48, %49 : vector<16x512xf32>
    %cst_21 = arith.constant 1.000000e-01 : f32
    %51 = vector.broadcast %cst_21 : f32 to vector<16x512xf32>
    %52 = arith.mulf %51, %50 : vector<16x512xf32>
    %53 = arith.maximumf %50, %52 : vector<16x512xf32>
    %54 = arith.truncf %53 : vector<16x512xf32> to vector<16x512xbf16>
    %c0_22 = arith.constant 0 : index
    %c0_23 = arith.constant 0 : index
    %55 = vector.load %arg5[%c0_22, %c0_23] : memref<512x256xbf16, #tpu.memory_space<vmem>>, vector<512x256xbf16>
    %cst_24 = arith.constant dense<0.000000e+00> : vector<16x256xf32>
    %56 = tpu.matmul %54, %55, %cst_24 {dimension_numbers = #tpu.dot_dimension_numbers<[1], [0], [0], [1], [0, 0, 1, 1], [], []>} : vector<16x512xbf16>, vector<512x256xbf16>, vector<16x256xf32> -> vector<16x256xf32>
    %c0_25 = arith.constant 0 : index
    %c0_26 = arith.constant 0 : index
    %57 = vector.load %arg6[%c0_25, %c0_26] : memref<3x256xf32, #tpu.memory_space<vmem>>, vector<1x256xf32>
    %58 = vector.broadcast %57 : vector<1x256xf32> to vector<16x256xf32>
    %59 = arith.addf %56, %58 : vector<16x256xf32>
    %c1_27 = arith.constant 1 : index
    %c0_28 = arith.constant 0 : index
    %60 = vector.load %arg6[%c1_27, %c0_28] : memref<3x256xf32, #tpu.memory_space<vmem>>, vector<1x256xf32>
    %c2_29 = arith.constant 2 : index
    %c0_30 = arith.constant 0 : index
    %61 = vector.load %arg6[%c2_29, %c0_30] : memref<3x256xf32, #tpu.memory_space<vmem>>, vector<1x256xf32>
    %cst_31 = arith.constant dense<0.000000e+00> : vector<16xf32>
    %62 = vector.multi_reduction <add>, %59, %cst_31 [1] : vector<16x256xf32> to vector<16xf32>
    %63 = vector.shape_cast %62 : vector<16xf32> to vector<16x1xf32>
    %cst_32 = arith.constant 2.560000e+02 : f32
    %64 = vector.broadcast %cst_32 : f32 to vector<16x1xf32>
    %65 = arith.divf %63, %64 : vector<16x1xf32>
    %66 = vector.broadcast %65 : vector<16x1xf32> to vector<16x256xf32>
    %67 = arith.subf %59, %66 : vector<16x256xf32>
    %68 = arith.mulf %67, %67 : vector<16x256xf32>
    %cst_33 = arith.constant dense<0.000000e+00> : vector<16xf32>
    %69 = vector.multi_reduction <add>, %68, %cst_33 [1] : vector<16x256xf32> to vector<16xf32>
    %70 = vector.shape_cast %69 : vector<16xf32> to vector<16x1xf32>
    %cst_34 = arith.constant 2.560000e+02 : f32
    %71 = vector.broadcast %cst_34 : f32 to vector<16x1xf32>
    %72 = arith.divf %70, %71 : vector<16x1xf32>
    %cst_35 = arith.constant 9.99999974E-6 : f32
    %73 = vector.broadcast %cst_35 : f32 to vector<16x1xf32>
    %74 = arith.addf %72, %73 : vector<16x1xf32>
    %75 = math.rsqrt %74 : vector<16x1xf32>
    %76 = vector.broadcast %75 : vector<16x1xf32> to vector<16x256xf32>
    %77 = arith.mulf %67, %76 : vector<16x256xf32>
    %78 = vector.broadcast %60 : vector<1x256xf32> to vector<16x256xf32>
    %79 = arith.mulf %77, %78 : vector<16x256xf32>
    %80 = vector.broadcast %61 : vector<1x256xf32> to vector<16x256xf32>
    %81 = arith.addf %79, %80 : vector<16x256xf32>
    %cst_36 = arith.constant 1.000000e-01 : f32
    %82 = vector.broadcast %cst_36 : f32 to vector<16x256xf32>
    %83 = arith.mulf %82, %81 : vector<16x256xf32>
    %84 = arith.maximumf %81, %83 : vector<16x256xf32>
    %85 = arith.truncf %84 : vector<16x256xf32> to vector<16x256xbf16>
    %c0_37 = arith.constant 0 : index
    %c0_38 = arith.constant 0 : index
    %86 = vector.load %arg7[%c0_37, %c0_38] : memref<256x128xbf16, #tpu.memory_space<vmem>>, vector<256x128xbf16>
    %cst_39 = arith.constant dense<0.000000e+00> : vector<16x128xf32>
    %87 = tpu.matmul %85, %86, %cst_39 {dimension_numbers = #tpu.dot_dimension_numbers<[1], [0], [0], [1], [0, 0, 1, 1], [], []>} : vector<16x256xbf16>, vector<256x128xbf16>, vector<16x128xf32> -> vector<16x128xf32>
    %c0_40 = arith.constant 0 : index
    %c0_41 = arith.constant 0 : index
    %88 = vector.load %arg8[%c0_40, %c0_41] : memref<3x128xf32, #tpu.memory_space<vmem>>, vector<1x128xf32>
    %89 = vector.broadcast %88 : vector<1x128xf32> to vector<16x128xf32>
    %90 = arith.addf %87, %89 : vector<16x128xf32>
    %c1_42 = arith.constant 1 : index
    %c0_43 = arith.constant 0 : index
    %91 = vector.load %arg8[%c1_42, %c0_43] : memref<3x128xf32, #tpu.memory_space<vmem>>, vector<1x128xf32>
    %c2_44 = arith.constant 2 : index
    %c0_45 = arith.constant 0 : index
    %92 = vector.load %arg8[%c2_44, %c0_45] : memref<3x128xf32, #tpu.memory_space<vmem>>, vector<1x128xf32>
    %cst_46 = arith.constant dense<0.000000e+00> : vector<16xf32>
    %93 = vector.multi_reduction <add>, %90, %cst_46 [1] : vector<16x128xf32> to vector<16xf32>
    %94 = vector.shape_cast %93 : vector<16xf32> to vector<16x1xf32>
    %cst_47 = arith.constant 1.280000e+02 : f32
    %95 = vector.broadcast %cst_47 : f32 to vector<16x1xf32>
    %96 = arith.divf %94, %95 : vector<16x1xf32>
    %97 = vector.broadcast %96 : vector<16x1xf32> to vector<16x128xf32>
    %98 = arith.subf %90, %97 : vector<16x128xf32>
    %99 = arith.mulf %98, %98 : vector<16x128xf32>
    %cst_48 = arith.constant dense<0.000000e+00> : vector<16xf32>
    %100 = vector.multi_reduction <add>, %99, %cst_48 [1] : vector<16x128xf32> to vector<16xf32>
    %101 = vector.shape_cast %100 : vector<16xf32> to vector<16x1xf32>
    %cst_49 = arith.constant 1.280000e+02 : f32
    %102 = vector.broadcast %cst_49 : f32 to vector<16x1xf32>
    %103 = arith.divf %101, %102 : vector<16x1xf32>
    %cst_50 = arith.constant 9.99999974E-6 : f32
    %104 = vector.broadcast %cst_50 : f32 to vector<16x1xf32>
    %105 = arith.addf %103, %104 : vector<16x1xf32>
    %106 = math.rsqrt %105 : vector<16x1xf32>
    %107 = vector.broadcast %106 : vector<16x1xf32> to vector<16x128xf32>
    %108 = arith.mulf %98, %107 : vector<16x128xf32>
    %109 = vector.broadcast %91 : vector<1x128xf32> to vector<16x128xf32>
    %110 = arith.mulf %108, %109 : vector<16x128xf32>
    %111 = vector.broadcast %92 : vector<1x128xf32> to vector<16x128xf32>
    %112 = arith.addf %110, %111 : vector<16x128xf32>
    %cst_51 = arith.constant 1.000000e-01 : f32
    %113 = vector.broadcast %cst_51 : f32 to vector<16x128xf32>
    %114 = arith.mulf %113, %112 : vector<16x128xf32>
    %115 = arith.maximumf %112, %114 : vector<16x128xf32>
    %116 = arith.truncf %115 : vector<16x128xf32> to vector<16x128xbf16>
    %c0_52 = arith.constant 0 : index
    %c0_53 = arith.constant 0 : index
    %117 = vector.load %arg9[%c0_52, %c0_53] : memref<128x192xbf16, #tpu.memory_space<vmem>>, vector<128x192xbf16>
    %cst_54 = arith.constant dense<0.000000e+00> : vector<16x192xf32>
    %118 = tpu.matmul %116, %117, %cst_54 {dimension_numbers = #tpu.dot_dimension_numbers<[1], [0], [0], [1], [0, 0, 1, 1], [], []>} : vector<16x128xbf16>, vector<128x192xbf16>, vector<16x192xf32> -> vector<16x192xf32>
    %c0_55 = arith.constant 0 : index
    %c0_56 = arith.constant 0 : index
    %119 = vector.load %arg10[%c0_55, %c0_56] : memref<1x192xf32, #tpu.memory_space<vmem>>, vector<1x192xf32>
    %120 = vector.broadcast %119 : vector<1x192xf32> to vector<16x192xf32>
    %121 = arith.addf %118, %120 : vector<16x192xf32>
    %122 = vector.extract_strided_slice %121 {offsets = [0, 0], sizes = [16, 128], strides = [1, 1]} : vector<16x192xf32> to vector<16x128xf32>
    %123 = vector.extract_strided_slice %121 {offsets = [0, 128], sizes = [16, 64], strides = [1, 1]} : vector<16x192xf32> to vector<16x64xf32>
    %c0_57 = arith.constant 0 : index
    %c0_58 = arith.constant 0 : index
    %124 = vector.load %arg11[%c0_57, %c0_58] : memref<2x128xf32, #tpu.memory_space<vmem>>, vector<1x128xf32>
    %c1_59 = arith.constant 1 : index
    %c0_60 = arith.constant 0 : index
    %125 = vector.load %arg11[%c1_59, %c0_60] : memref<2x128xf32, #tpu.memory_space<vmem>>, vector<1x128xf32>
    %cst_61 = arith.constant dense<0.000000e+00> : vector<16xf32>
    %126 = vector.multi_reduction <add>, %122, %cst_61 [1] : vector<16x128xf32> to vector<16xf32>
    %127 = vector.shape_cast %126 : vector<16xf32> to vector<16x1xf32>
    %cst_62 = arith.constant 1.280000e+02 : f32
    %128 = vector.broadcast %cst_62 : f32 to vector<16x1xf32>
    %129 = arith.divf %127, %128 : vector<16x1xf32>
    %130 = vector.broadcast %129 : vector<16x1xf32> to vector<16x128xf32>
    %131 = arith.subf %122, %130 : vector<16x128xf32>
    %132 = arith.mulf %131, %131 : vector<16x128xf32>
    %cst_63 = arith.constant dense<0.000000e+00> : vector<16xf32>
    %133 = vector.multi_reduction <add>, %132, %cst_63 [1] : vector<16x128xf32> to vector<16xf32>
    %134 = vector.shape_cast %133 : vector<16xf32> to vector<16x1xf32>
    %cst_64 = arith.constant 1.280000e+02 : f32
    %135 = vector.broadcast %cst_64 : f32 to vector<16x1xf32>
    %136 = arith.divf %134, %135 : vector<16x1xf32>
    %cst_65 = arith.constant 9.99999974E-6 : f32
    %137 = vector.broadcast %cst_65 : f32 to vector<16x1xf32>
    %138 = arith.addf %136, %137 : vector<16x1xf32>
    %139 = math.rsqrt %138 : vector<16x1xf32>
    %140 = vector.broadcast %139 : vector<16x1xf32> to vector<16x128xf32>
    %141 = arith.mulf %131, %140 : vector<16x128xf32>
    %142 = vector.broadcast %124 : vector<1x128xf32> to vector<16x128xf32>
    %143 = arith.mulf %141, %142 : vector<16x128xf32>
    %144 = vector.broadcast %125 : vector<1x128xf32> to vector<16x128xf32>
    %145 = arith.addf %143, %144 : vector<16x128xf32>
    %cst_66 = arith.constant 1.000000e-01 : f32
    %146 = vector.broadcast %cst_66 : f32 to vector<16x128xf32>
    %147 = arith.mulf %146, %145 : vector<16x128xf32>
    %148 = arith.maximumf %145, %147 : vector<16x128xf32>
    %c0_67 = arith.constant 0 : index
    %c0_68 = arith.constant 0 : index
    %149 = vector.load %arg12[%c0_67, %c0_68] : memref<3x64xf32, #tpu.memory_space<vmem>>, vector<1x64xf32>
    %c1_69 = arith.constant 1 : index
    %c0_70 = arith.constant 0 : index
    %150 = vector.load %arg12[%c1_69, %c0_70] : memref<3x64xf32, #tpu.memory_space<vmem>>, vector<1x64xf32>
    %cst_71 = arith.constant dense<0.000000e+00> : vector<16xf32>
    %151 = vector.multi_reduction <add>, %123, %cst_71 [1] : vector<16x64xf32> to vector<16xf32>
    %152 = vector.shape_cast %151 : vector<16xf32> to vector<16x1xf32>
    %cst_72 = arith.constant 6.400000e+01 : f32
    %153 = vector.broadcast %cst_72 : f32 to vector<16x1xf32>
    %154 = arith.divf %152, %153 : vector<16x1xf32>
    %155 = vector.broadcast %154 : vector<16x1xf32> to vector<16x64xf32>
    %156 = arith.subf %123, %155 : vector<16x64xf32>
    %157 = arith.mulf %156, %156 : vector<16x64xf32>
    %cst_73 = arith.constant dense<0.000000e+00> : vector<16xf32>
    %158 = vector.multi_reduction <add>, %157, %cst_73 [1] : vector<16x64xf32> to vector<16xf32>
    %159 = vector.shape_cast %158 : vector<16xf32> to vector<16x1xf32>
    %cst_74 = arith.constant 6.400000e+01 : f32
    %160 = vector.broadcast %cst_74 : f32 to vector<16x1xf32>
    %161 = arith.divf %159, %160 : vector<16x1xf32>
    %cst_75 = arith.constant 9.99999974E-6 : f32
    %162 = vector.broadcast %cst_75 : f32 to vector<16x1xf32>
    %163 = arith.addf %161, %162 : vector<16x1xf32>
    %164 = math.rsqrt %163 : vector<16x1xf32>
    %165 = vector.broadcast %164 : vector<16x1xf32> to vector<16x64xf32>
    %166 = arith.mulf %156, %165 : vector<16x64xf32>
    %167 = vector.broadcast %149 : vector<1x64xf32> to vector<16x64xf32>
    %168 = arith.mulf %166, %167 : vector<16x64xf32>
    %169 = vector.broadcast %150 : vector<1x64xf32> to vector<16x64xf32>
    %170 = arith.addf %168, %169 : vector<16x64xf32>
    %cst_76 = arith.constant 1.000000e-01 : f32
    %171 = vector.broadcast %cst_76 : f32 to vector<16x64xf32>
    %172 = arith.mulf %171, %170 : vector<16x64xf32>
    %173 = arith.maximumf %170, %172 : vector<16x64xf32>
    %c2_77 = arith.constant 2 : index
    %c0_78 = arith.constant 0 : index
    %174 = vector.load %arg12[%c2_77, %c0_78] : memref<3x64xf32, #tpu.memory_space<vmem>>, vector<1x64xf32>
    %175 = vector.broadcast %174 : vector<1x64xf32> to vector<16x64xf32>
    %176 = arith.mulf %173, %175 : vector<16x64xf32>
    %cst_79 = arith.constant dense<0.000000e+00> : vector<16xf32>
    %177 = vector.multi_reduction <add>, %176, %cst_79 [1] : vector<16x64xf32> to vector<16xf32>
    %178 = vector.shape_cast %177 : vector<16xf32> to vector<16x1xf32>
    %c0_80 = arith.constant 0 : index
    %c0_81 = arith.constant 0 : index
    %179 = vector.load %arg15[%c0_80, %c0_81] : memref<1x1xf32, #tpu.memory_space<vmem>>, vector<1x1xf32>
    %180 = vector.broadcast %179 : vector<1x1xf32> to vector<16x1xf32>
    %181 = arith.addf %178, %180 : vector<16x1xf32>
    %182 = arith.truncf %148 : vector<16x128xf32> to vector<16x128xbf16>
    %c0_82 = arith.constant 0 : index
    %c0_83 = arith.constant 0 : index
    %183 = vector.load %arg13[%c0_82, %c0_83] : memref<128x128xbf16, #tpu.memory_space<vmem>>, vector<128x128xbf16>
    %cst_84 = arith.constant dense<0.000000e+00> : vector<16x128xf32>
    %184 = tpu.matmul %182, %183, %cst_84 {dimension_numbers = #tpu.dot_dimension_numbers<[1], [0], [0], [1], [0, 0, 1, 1], [], []>} : vector<16x128xbf16>, vector<128x128xbf16>, vector<16x128xf32> -> vector<16x128xf32>
    %c0_85 = arith.constant 0 : index
    %c0_86 = arith.constant 0 : index
    %185 = vector.load %arg14[%c0_85, %c0_86] : memref<1x128xf32, #tpu.memory_space<vmem>>, vector<1x128xf32>
    %186 = vector.broadcast %185 : vector<1x128xf32> to vector<16x128xf32>
    %187 = arith.addf %184, %186 : vector<16x128xf32>
    %cst_87 = arith.constant dense<0.000000e+00> : vector<16xf32>
    %188 = vector.multi_reduction <add>, %187, %cst_87 [1] : vector<16x128xf32> to vector<16xf32>
    %189 = vector.shape_cast %188 : vector<16xf32> to vector<16x1xf32>
    %cst_88 = arith.constant 2.500000e-01 : f32
    %190 = vector.broadcast %cst_88 : f32 to vector<16x1xf32>
    %191 = arith.mulf %189, %190 : vector<16x1xf32>
    %192 = vector.broadcast %191 : vector<16x1xf32> to vector<16x128xf32>
    %193 = arith.subf %187, %192 : vector<16x128xf32>
    %194 = vector.broadcast %181 : vector<16x1xf32> to vector<16x128xf32>
    %195 = arith.addf %194, %193 : vector<16x128xf32>
    %c0_89 = arith.constant 0 : index
    %c0_90 = arith.constant 0 : index
    %196 = vector.load %arg16[%c0_89, %c0_90] : memref<16x128xf32, #tpu.memory_space<vmem>>, vector<16x128xf32>
    tpu.vector_store %arg16[%c0_89, %c0_90], %195 {strides = array<i32>} : memref<16x128xf32, #tpu.memory_space<vmem>>, vector<16x128xf32>,
    return
  }
  func.func @transform_0(%arg0: i32) -> (i32, i32) {
    %c0_i32 = arith.constant 0 : i32
    %c0_i32_0 = arith.constant 0 : i32
    return %arg0, %c0_i32 : i32, i32
  }
  func.func @transform_1(%arg0: i32) -> (i32, i32) {
    %c0_i32 = arith.constant 0 : i32
    %c0_i32_0 = arith.constant 0 : i32
    %c0_i32_1 = arith.constant 0 : i32
    return %c0_i32, %c0_i32_0 : i32, i32
  }
  func.func @transform_2(%arg0: i32) -> (i32, i32) {
    %c0_i32 = arith.constant 0 : i32
    %c0_i32_0 = arith.constant 0 : i32
    %c0_i32_1 = arith.constant 0 : i32
    return %c0_i32, %c0_i32_0 : i32, i32
  }
  func.func @transform_3(%arg0: i32) -> (i32, i32) {
    %c0_i32 = arith.constant 0 : i32
    %c0_i32_0 = arith.constant 0 : i32
    %c0_i32_1 = arith.constant 0 : i32
    return %c0_i32, %c0_i32_0 : i32, i32
  }
  func.func @transform_4(%arg0: i32) -> (i32, i32) {
    %c0_i32 = arith.constant 0 : i32
    %c0_i32_0 = arith.constant 0 : i32
    %c0_i32_1 = arith.constant 0 : i32
    return %c0_i32, %c0_i32_0 : i32, i32
  }
  func.func @transform_5(%arg0: i32) -> (i32, i32) {
    %c0_i32 = arith.constant 0 : i32
    %c0_i32_0 = arith.constant 0 : i32
    %c0_i32_1 = arith.constant 0 : i32
    return %c0_i32, %c0_i32_0 : i32, i32
  }
  func.func @transform_6(%arg0: i32) -> (i32, i32) {
    %c0_i32 = arith.constant 0 : i32
    %c0_i32_0 = arith.constant 0 : i32
    %c0_i32_1 = arith.constant 0 : i32
    return %c0_i32, %c0_i32_0 : i32, i32
  }
  func.func @transform_7(%arg0: i32) -> (i32, i32) {
    %c0_i32 = arith.constant 0 : i32
    %c0_i32_0 = arith.constant 0 : i32
    %c0_i32_1 = arith.constant 0 : i32
    return %c0_i32, %c0_i32_0 : i32, i32
  }
  func.func @transform_8(%arg0: i32) -> (i32, i32) {
    %c0_i32 = arith.constant 0 : i32
    %c0_i32_0 = arith.constant 0 : i32
    %c0_i32_1 = arith.constant 0 : i32
    return %c0_i32, %c0_i32_0 : i32, i32
  }
  func.func @transform_9(%arg0: i32) -> (i32, i32) {
    %c0_i32 = arith.constant 0 : i32
    %c0_i32_0 = arith.constant 0 : i32
    %c0_i32_1 = arith.constant 0 : i32
    return %c0_i32, %c0_i32_0 : i32, i32
  }
  func.func @transform_10(%arg0: i32) -> (i32, i32) {
    %c0_i32 = arith.constant 0 : i32
    %c0_i32_0 = arith.constant 0 : i32
    %c0_i32_1 = arith.constant 0 : i32
    return %c0_i32, %c0_i32_0 : i32, i32
  }
  func.func @transform_11(%arg0: i32) -> (i32, i32) {
    %c0_i32 = arith.constant 0 : i32
    %c0_i32_0 = arith.constant 0 : i32
    %c0_i32_1 = arith.constant 0 : i32
    return %c0_i32, %c0_i32_0 : i32, i32
  }
  func.func @transform_12(%arg0: i32) -> (i32, i32) {
    %c0_i32 = arith.constant 0 : i32
    %c0_i32_0 = arith.constant 0 : i32
    %c0_i32_1 = arith.constant 0 : i32
    return %c0_i32, %c0_i32_0 : i32, i32
  }
  func.func @transform_13(%arg0: i32) -> (i32, i32) {
    %c0_i32 = arith.constant 0 : i32
    %c0_i32_0 = arith.constant 0 : i32
    %c0_i32_1 = arith.constant 0 : i32
    return %c0_i32, %c0_i32_0 : i32, i32
  }
  func.func @transform_14(%arg0: i32) -> (i32, i32) {
    %c0_i32 = arith.constant 0 : i32
    %c0_i32_0 = arith.constant 0 : i32
    %c0_i32_1 = arith.constant 0 : i32
    return %c0_i32, %c0_i32_0 : i32, i32
  }
  func.func @transform_15(%arg0: i32) -> (i32, i32) {
    %c0_i32 = arith.constant 0 : i32
    %c0_i32_0 = arith.constant 0 : i32
    return %arg0, %c0_i32 : i32, i32
  }
}

</mosaic_0001>

<llo_original>
// kernel: dueling_dqn_forward.1
$region0: #{dueling_dqn_forward.1}
  #allocation0 [shape = 'u32[]', space=smem, size = 0x4, offset = 0x4, fixed_abs, tag = 'smem constant byte address 0x4 - core index']
  #allocation1 [shape = 'u32[72,128]{1,0:T(1,128)}', space=vmem, size = 0x9000, scoped, tag = 'internal scratch']
  #allocation2 [shape = 'f32[1,1]{1,0:T(1,128)S(1)}', space=vmem, size = 0x200, scoped, tag = 'scoped memory for dueling_dqn_forward.1']
  %s0 = inlined_call_operand.vmem [shape: f32[16,32], index: 0, kind: input, shape index: {}]
  %s1 = inlined_call_operand.vmem [shape: f32[2,32], index: 1, kind: input, shape index: {}]
  %s2 = inlined_call_operand.vmem [shape: bf16[32,512], index: 2, kind: input, shape index: {}]
  %s3 = inlined_call_operand.vmem [shape: f32[3,512], index: 3, kind: input, shape index: {}]
  %s4 = inlined_call_operand.hbm [shape: bf16[512,256], index: 4, kind: input, shape index: {}]
  %s5 = inlined_call_operand.vmem [shape: f32[3,256], index: 5, kind: input, shape index: {}]
  %s6 = inlined_call_operand.vmem [shape: bf16[256,128], index: 6, kind: input, shape index: {}]
  %s7 = inlined_call_operand.vmem [shape: f32[3,128], index: 7, kind: input, shape index: {}]
  %s8 = inlined_call_operand.vmem [shape: bf16[128,192], index: 8, kind: input, shape index: {}]
  %s9 = inlined_call_operand.vmem [shape: f32[1,192], index: 9, kind: input, shape index: {}]
  %s10 = inlined_call_operand.vmem [shape: f32[2,128], index: 10, kind: input, shape index: {}]
  %s11 = inlined_call_operand.vmem [shape: f32[3,64], index: 11, kind: input, shape index: {}]
  %s12 = inlined_call_operand.hbm [shape: bf16[128,128], index: 12, kind: input, shape index: {}]
  %s13 = inlined_call_operand.vmem [shape: f32[1,128], index: 13, kind: input, shape index: {}]
  %s14 = inlined_call_operand.<no memory space> [shape: f32[1,1], index: 14, kind: input, shape index: {}]
  %s15 = inlined_call_operand.vmem [shape: f32[16,128], index: 15, kind: output, shape index: {}]
  %s16 = sld [smem:[#allocation0]]
  $region78: #{dueling_dqn_forward.1} parent=0
    _
  %s18 = ssub.s32 1, %s16
  %s19 = scalar_select 0, %s18, %s16
  %v20 = vstv %s14
  %21 = vst [vmem:[#allocation2] sm:$0x1] %v20
  $region1: #{dueling_dqn_forward.1} parent=0
    #allocation3 [shape = 'u8[262144]{0}', space=vmem, size = 0x40000, scoped, tag = 'input window, operand 4, single buffered']
    #allocation4 [shape = 's32[1]{0}', space=sflag, size = 0x4, scoped, tag = 'scoped memory for dueling_dqn_forward.1']
    #allocation5 [shape = 'u8[32768]{0}', space=vmem, size = 0x8000, scoped, tag = 'input window, operand 12, single buffered']
    #allocation6 [shape = 's32[1]{0}', space=sflag, size = 0x4, scoped, tag = 'scoped memory for dueling_dqn_forward.1']
    %22 = vsyncpa [#allocation4], 0
    %23 = vsyncpa [#allocation6], 0
    // Predicated region
    $region2: #{dueling_dqn_forward.1} parent=1 // pred_check
      _
    $region3: #{dueling_dqn_forward.1} parent=1 // pred_check_branch
      %25 = sbr.rel (0) target = $region5
    $region4: #{dueling_dqn_forward.1} parent=1 // pred_region
      _
    $region5: #{dueling_dqn_forward.1} parent=1 // pred_fallthru
      _
    // Predicated region
    $region6: #{dueling_dqn_forward.1} parent=1 // pred_check
      _
    $region7: #{dueling_dqn_forward.1} parent=1 // pred_check_branch
      %27 = sbr.rel (0) target = $region9
    $region8: #{dueling_dqn_forward.1} parent=1 // pred_region
      _
    $region9: #{dueling_dqn_forward.1} parent=1 // pred_fallthru
      _
    // Predicated region
    $region10: #{dueling_dqn_forward.1} parent=1 // pred_check
      _
    $region11: #{dueling_dqn_forward.1} parent=1 // pred_check_branch
      %29 = sbr.rel (0) target = $region13
    $region12: #{dueling_dqn_forward.1} parent=1 // pred_region
      _
    $region13: #{dueling_dqn_forward.1} parent=1 // pred_fallthru
      _
    // Predicated region
    $region14: #{dueling_dqn_forward.1} parent=1 // pred_check
      _
    $region15: #{dueling_dqn_forward.1} parent=1 // pred_check_branch
      %31 = sbr.rel (0) target = $region17
    $region16: #{dueling_dqn_forward.1} parent=1 // pred_region
      _
    $region17: #{dueling_dqn_forward.1} parent=1 // pred_fallthru
      _
    // Predicated region
    $region18: #{dueling_dqn_forward.1} parent=1 // pred_check
      _
    $region19: #{dueling_dqn_forward.1} parent=1 // pred_check_branch
      %33 = sbr.rel (0) target = $region21
    $region20: #{dueling_dqn_forward.1} parent=1 // pred_region
      %35 = vsyncadd [#allocation4], 0
      %s36 = sshll.u32 %s4, 4
      %s37 = int_to_ptr.hbm [resolvable:$true] %s36
      %s38 = sshll.u32 [#allocation3], 4
      %s39 = int_to_ptr.vmem [resolvable:$true] %s38
      %44 = dma.hbm_to_vmem [thread:$0]  %s37, 8192, %s39, [#allocation4], 128, 128, 8
    $region21: #{dueling_dqn_forward.1} parent=1 // pred_fallthru
      _
    // Predicated region
    $region22: #{dueling_dqn_forward.1} parent=1 // pred_check
      _
    $region23: #{dueling_dqn_forward.1} parent=1 // pred_check_branch
      %46 = sbr.rel (0) target = $region25
    $region24: #{dueling_dqn_forward.1} parent=1 // pred_region
      _
    $region25: #{dueling_dqn_forward.1} parent=1 // pred_fallthru
      _
    // Predicated region
    $region26: #{dueling_dqn_forward.1} parent=1 // pred_check
      _
    $region27: #{dueling_dqn_forward.1} parent=1 // pred_check_branch
      %48 = sbr.rel (0) target = $region29
    $region28: #{dueling_dqn_forward.1} parent=1 // pred_region
      _
    $region29: #{dueling_dqn_forward.1} parent=1 // pred_fallthru
      _
    // Predicated region
    $region30: #{dueling_dqn_forward.1} parent=1 // pred_check
      _
    $region31: #{dueling_dqn_forward.1} parent=1 // pred_check_branch
      %50 = sbr.rel (0) target = $region33
    $region32: #{dueling_dqn_forward.1} parent=1 // pred_region
      _
    $region33: #{dueling_dqn_forward.1} parent=1 // pred_fallthru
      _
    // Predicated region
    $region34: #{dueling_dqn_forward.1} parent=1 // pred_check
      _
    $region35: #{dueling_dqn_forward.1} parent=1 // pred_check_branch
      %52 = sbr.rel (0) target = $region37
    $region36: #{dueling_dqn_forward.1} parent=1 // pred_region
      _
    $region37: #{dueling_dqn_forward.1} parent=1 // pred_fallthru
      _
    // Predicated region
    $region38: #{dueling_dqn_forward.1} parent=1 // pred_check
      _
    $region39: #{dueling_dqn_forward.1} parent=1 // pred_check_branch
      %54 = sbr.rel (0) target = $region41
    $region40: #{dueling_dqn_forward.1} parent=1 // pred_region
      _
    $region41: #{dueling_dqn_forward.1} parent=1 // pred_fallthru
      _
    // Predicated region
    $region42: #{dueling_dqn_forward.1} parent=1 // pred_check
      _
    $region43: #{dueling_dqn_forward.1} parent=1 // pred_check_branch
      %56 = sbr.rel (0) target = $region45
    $region44: #{dueling_dqn_forward.1} parent=1 // pred_region
      _
    $region45: #{dueling_dqn_forward.1} parent=1 // pred_fallthru
      _
    // Predicated region
    $region46: #{dueling_dqn_forward.1} parent=1 // pred_check
      _
    $region47: #{dueling_dqn_forward.1} parent=1 // pred_check_branch
      %58 = sbr.rel (0) target = $region49
    $region48: #{dueling_dqn_forward.1} parent=1 // pred_region
      _
    $region49: #{dueling_dqn_forward.1} parent=1 // pred_fallthru
      _
    // Predicated region
    $region50: #{dueling_dqn_forward.1} parent=1 // pred_check
      _
    $region51: #{dueling_dqn_forward.1} parent=1 // pred_check_branch
      %60 = sbr.rel (0) target = $region53
    $region52: #{dueling_dqn_forward.1} parent=1 // pred_region
      %62 = vsyncadd [#allocation6], 0
      %s63 = sshll.u32 %s12, 4
      %s64 = int_to_ptr.hbm [resolvable:$true] %s63
      %s65 = sshll.u32 [#allocation5], 4
      %s66 = int_to_ptr.vmem [resolvable:$true] %s65
      %71 = dma.hbm_to_vmem [thread:$0]  %s64, 1024, %s66, [#allocation6], 64, 64, 4
    $region53: #{dueling_dqn_forward.1} parent=1 // pred_fallthru
      _
    // Predicated region
    $region54: #{dueling_dqn_forward.1} parent=1 // pred_check
      _
    $region55: #{dueling_dqn_forward.1} parent=1 // pred_check_branch
      %73 = sbr.rel (0) target = $region57
    $region56: #{dueling_dqn_forward.1} parent=1 // pred_region
      _
    $region57: #{dueling_dqn_forward.1} parent=1 // pred_fallthru
      _
    // Predicated region
    $region58: #{dueling_dqn_forward.1} parent=1 // pred_check
      _
    $region59: #{dueling_dqn_forward.1} parent=1 // pred_check_branch
      %75 = sbr.rel (0) target = $region61
    $region60: #{dueling_dqn_forward.1} parent=1 // pred_region
      _
    $region61: #{dueling_dqn_forward.1} parent=1 // pred_fallthru
      _
    // Predicated region
    $region62: #{dueling_dqn_forward.1} parent=1 // pred_check
      _
    $region63: #{dueling_dqn_forward.1} parent=1 // pred_check_branch
      %77 = sbr.rel (0) target = $region65
    $region64: #{dueling_dqn_forward.1} parent=1 // pred_region
      %79 = dma.done [#allocation4], 8192
    $region65: #{dueling_dqn_forward.1} parent=1 // pred_fallthru
      _
    // Predicated region
    $region66: #{dueling_dqn_forward.1} parent=1 // pred_check
      _
    $region67: #{dueling_dqn_forward.1} parent=1 // pred_check_branch
      %81 = sbr.rel (0) target = $region69
    $region68: #{dueling_dqn_forward.1} parent=1 // pred_region
      %83 = dma.done [#allocation6], 1024
    $region69: #{dueling_dqn_forward.1} parent=1 // pred_fallthru
      _
    %v85 = vld [vmem:[%s0] sm:$0xff]
    %v86 = vld [vmem:[%s0 + $0x8] sm:$0xff]
    %v87 = vld [vmem:[%s1] sm:$0x1]
    %v88 = vld [vmem:[%s1 + $0x1] sm:$0x1]
    %vm89 = vcmask 261120
    %v90 = vsel %vm89, %v85, 0.0
    %91 = vadd.xlane.f32.xlu0 %v90
    %v92 = vpop.xlane.xlu0 %91
    %v93 = vsel %vm89, %v86, 0.0
    %94 = vadd.xlane.f32.xlu0 %v93
    %v95 = vpop.xlane.xlu0 %94
    %v96 = vrcp.pop 32.0
    %v97 = vmul.f32 32.0, %v96
    %v98 = vsub.f32 1.0, %v97
    %v99 = vmul.f32 %v96, %v98
    %v100 = vadd.f32 %v96, %v99
    %vm101 = vweird.f32 %v96
    %v102 = vsel %vm101, %v96, %v100
    %v103 = vmul.f32 %v92, %v102
    %v104 = vmul.f32 %v95, %v102
    %v105 = vsub.f32 %v85, %v103
    %v106 = vsub.f32 %v86, %v104
    %v107 = vmul.f32 %v105, %v105
    %v108 = vmul.f32 %v106, %v106
    %v109 = vsel %vm89, %v107, 0.0
    %110 = vadd.xlane.f32.xlu0 %v109
    %v111 = vpop.xlane.xlu0 %110
    %v112 = vsel %vm89, %v108, 0.0
    %113 = vadd.xlane.f32.xlu0 %v112
    %v114 = vpop.xlane.xlu0 %113
    %v115 = vmul.f32 %v111, %v102
    %v116 = vmul.f32 %v114, %v102
    %v117 = vadd.f32 %v115, 1e-05
    %v118 = vadd.f32 %v116, 1e-05
    %v119 = vrsqrt.pop %v117
    %v120 = vmul.f32 %v119, %v117
    %v121 = vmul.f32 %v120, %v119
    %v122 = vmul.f32 0.5, %v121
    %v123 = vsub.f32 1.5, %v122
    %v124 = vmul.f32 %v119, %v123
    %vm125 = vweird.f32 %v117
    %vm126 = vweird.f32 %v119
    %vm127 = vmor %vm125, %vm126
    %v128 = vsel %vm127, %v119, %v124
    %v129 = vrsqrt.pop %v118
    %v130 = vmul.f32 %v129, %v118
    %v131 = vmul.f32 %v130, %v129
    %v132 = vmul.f32 0.5, %v131
    %v133 = vsub.f32 1.5, %v132
    %v134 = vmul.f32 %v129, %v133
    %vm135 = vweird.f32 %v118
    %vm136 = vweird.f32 %v129
    %vm137 = vmor %vm135, %vm136
    %v138 = vsel %vm137, %v129, %v134
    %v139 = vmul.f32 %v105, %v128
    %v140 = vmul.f32 %v106, %v138
    %v141 = vperm.slane %v87, 0
    %v142 = vmul.f32 %v139, %v141
    %v143 = vmul.f32 %v140, %v141
    %v144 = vperm.slane %v88, 0
    %v145 = vadd.f32 %v142, %v144
    %v146 = vadd.f32 %v143, %v144
    %v147 = vpack.c.bf16 %v146, %v145
    %v148 = vld [vmem:[%s2] sm:$0xff]
    %v149 = vld [vmem:[%s2 + $0x8] sm:$0xff]
    %v150 = vld [vmem:[%s2 + $0x10] sm:$0xff]
    %v151 = vld [vmem:[%s2 + $0x18] sm:$0xff]
    %v152 = vld [vmem:[%s2 + $0x20] sm:$0xff]
    %v153 = vld [vmem:[%s2 + $0x28] sm:$0xff]
    %v154 = vld [vmem:[%s2 + $0x30] sm:$0xff]
    %v155 = vld [vmem:[%s2 + $0x38] sm:$0xff]
    %v156 = vld [vmem:[%s3] ss:$4 sm:$0xf]
    %v158 = vperm.slane %v156, 0
    %v159 = vperm.slane %v156, 1
    %v160 = vperm.slane %v156, 2
    %v161 = vperm.slane %v156, 3
    %v174 = vunpack.c.l.b16 %v148
    %v175 = vunpack.c.h.b16 %v148
    %v176 = vunpack.c.l.b16 %v149
    %v177 = vunpack.c.h.b16 %v149
    %v178 = vunpack.c.l.b16 %v150
    %v179 = vunpack.c.h.b16 %v150
    %v180 = vunpack.c.l.b16 %v151
    %v181 = vunpack.c.h.b16 %v151
    %v182 = vunpack.c.l.b16 %v152
    %v183 = vunpack.c.h.b16 %v152
    %v184 = vunpack.c.l.b16 %v153
    %v185 = vunpack.c.h.b16 %v153
    %v186 = vunpack.c.l.b16 %v154
    %v187 = vunpack.c.h.b16 %v154
    %v188 = vunpack.c.l.b16 %v155
    %v189 = vunpack.c.h.b16 %v155
    %v190 = vpack.c.b16 %v178, %v174
    %v191 = vpack.c.b16 %v179, %v175
    %v192 = vpack.c.b16 %v180, %v176
    %v193 = vpack.c.b16 %v181, %v177
    %v194 = vpack.c.b16 %v186, %v182
    %v195 = vpack.c.b16 %v187, %v183
    %v196 = vpack.c.b16 %v188, %v184
    %v197 = vpack.c.b16 %v189, %v185
    %v207 = vsel %vm89, %v147, 0
    %209 = vmatpush.bf16.msra.mxu0 0
    %210 = vmatpush.bf16.msra.mxu0 0
    %211 = vmatpush.bf16.msra.mxu0 0
    %212 = vmatpush.bf16.msra.mxu0 0
    %213 = vmatpush.bf16.msra.mxu0 0
    %214 = vmatpush.bf16.msra.mxu0 0
    %215 = vmatpush.bf16.msra.mxu0 %v194
    %216 = vmatpush.bf16.msra.mxu0 %v190
    %217 = vmatmul.bf16.gmra.mxu0 %v207
    %v218 = vpop.f32.mrf.mxu0
    %v219 = vadd.f32 %v158, %v218
    %v220 = vpop.f32.mrf.mxu0
    %v221 = vadd.f32 %v158, %v220
    %222 = vdwg.mxu0
    %223 = vmatpush.bf16.msra.mxu0 0
    %224 = vmatpush.bf16.msra.mxu0 0
    %225 = vmatpush.bf16.msra.mxu0 0
    %226 = vmatpush.bf16.msra.mxu0 0
    %227 = vmatpush.bf16.msra.mxu0 0
    %228 = vmatpush.bf16.msra.mxu0 0
    %229 = vmatpush.bf16.msra.mxu0 %v195
    %230 = vmatpush.bf16.msra.mxu0 %v191
    %231 = vmatmul.bf16.gmra.mxu0 %v207
    %v232 = vpop.f32.mrf.mxu0
    %v233 = vadd.f32 %v159, %v232
    %v234 = vpop.f32.mrf.mxu0
    %v235 = vadd.f32 %v159, %v234
    %236 = vdwg.mxu0
    %237 = vmatpush.bf16.msra.mxu0 0
    %238 = vmatpush.bf16.msra.mxu0 0
    %239 = vmatpush.bf16.msra.mxu0 0
    %240 = vmatpush.bf16.msra.mxu0 0
    %241 = vmatpush.bf16.msra.mxu0 0
    %242 = vmatpush.bf16.msra.mxu0 0
    %243 = vmatpush.bf16.msra.mxu0 %v196
    %244 = vmatpush.bf16.msra.mxu0 %v192
    %245 = vmatmul.bf16.gmra.mxu0 %v207
    %v246 = vpop.f32.mrf.mxu0
    %v247 = vadd.f32 %v160, %v246
    %v248 = vpop.f32.mrf.mxu0
    %v249 = vadd.f32 %v160, %v248
    %250 = vdwg.mxu0
    %251 = vmatpush.bf16.msra.mxu0 0
    %252 = vmatpush.bf16.msra.mxu0 0
    %253 = vmatpush.bf16.msra.mxu0 0
    %254 = vmatpush.bf16.msra.mxu0 0
    %255 = vmatpush.bf16.msra.mxu0 0
    %256 = vmatpush.bf16.msra.mxu0 0
    %257 = vmatpush.bf16.msra.mxu0 %v197
    %258 = vmatpush.bf16.msra.mxu0 %v193
    %259 = vmatmul.bf16.gmra.mxu0 %v207
    %v260 = vpop.f32.mrf.mxu0
    %v261 = vadd.f32 %v161, %v260
    %v262 = vpop.f32.mrf.mxu0
    %v263 = vadd.f32 %v161, %v262
    %264 = vdwg.mxu0
    %s265 = scalar_lea.vmem %s3, 1
    %v266 = vld [vmem:[%s265] ss:$4 sm:$0xf]
    %s267 = scalar_lea.vmem %s3, 2
    %v268 = vld [vmem:[%s267] ss:$4 sm:$0xf]
    %v269 = vadd.f32 %v219, %v233
    %v270 = vadd.f32 %v269, %v247
    %v271 = vadd.f32 %v270, %v261
    %272 = vadd.xlane.f32.xlu0 %v271
    %v273 = vpop.xlane.xlu0 %272
    %v274 = vadd.f32 %v221, %v235
    %v275 = vadd.f32 %v274, %v249
    %v276 = vadd.f32 %v275, %v263
    %277 = vadd.xlane.f32.xlu0 %v276
    %v278 = vpop.xlane.xlu0 %277
    %v279 = vrcp.pop 512.0
    %v280 = vmul.f32 512.0, %v279
    %v281 = vsub.f32 1.0, %v280
    %v282 = vmul.f32 %v279, %v281
    %v283 = vadd.f32 %v279, %v282
    %vm284 = vweird.f32 %v279
    %v285 = vsel %vm284, %v279, %v283
    %v286 = vmul.f32 %v273, %v285
    %v287 = vmul.f32 %v278, %v285
    %v288 = vsub.f32 %v219, %v286
    %v289 = vsub.f32 %v233, %v286
    %v290 = vsub.f32 %v247, %v286
    %v291 = vsub.f32 %v261, %v286
    %v292 = vsub.f32 %v221, %v287
    %v293 = vsub.f32 %v235, %v287
    %v294 = vsub.f32 %v249, %v287
    %v295 = vsub.f32 %v263, %v287
    %v296 = vmul.f32 %v288, %v288
    %v297 = vmul.f32 %v289, %v289
    %v298 = vmul.f32 %v290, %v290
    %v299 = vmul.f32 %v291, %v291
    %v300 = vmul.f32 %v292, %v292
    %v301 = vmul.f32 %v293, %v293
    %v302 = vmul.f32 %v294, %v294
    %v303 = vmul.f32 %v295, %v295
    %v304 = vadd.f32 %v296, %v297
    %v305 = vadd.f32 %v304, %v298
    %v306 = vadd.f32 %v305, %v299
    %307 = vadd.xlane.f32.xlu0 %v306
    %v308 = vpop.xlane.xlu0 %307
    %v309 = vadd.f32 %v300, %v301
    %v310 = vadd.f32 %v309, %v302
    %v311 = vadd.f32 %v310, %v303
    %312 = vadd.xlane.f32.xlu0 %v311
    %v313 = vpop.xlane.xlu0 %312
    %v314 = vmul.f32 %v308, %v285
    %v315 = vmul.f32 %v313, %v285
    %v316 = vadd.f32 %v314, 1e-05
    %v317 = vadd.f32 %v315, 1e-05
    %v318 = vrsqrt.pop %v316
    %v319 = vmul.f32 %v318, %v316
    %v320 = vmul.f32 %v319, %v318
    %v321 = vmul.f32 0.5, %v320
    %v322 = vsub.f32 1.5, %v321
    %v323 = vmul.f32 %v318, %v322
    %vm324 = vweird.f32 %v316
    %vm325 = vweird.f32 %v318
    %vm326 = vmor %vm324, %vm325
    %v327 = vsel %vm326, %v318, %v323
    %v328 = vrsqrt.pop %v317
    %v329 = vmul.f32 %v328, %v317
    %v330 = vmul.f32 %v329, %v328
    %v331 = vmul.f32 0.5, %v330
    %v332 = vsub.f32 1.5, %v331
    %v333 = vmul.f32 %v328, %v332
    %vm334 = vweird.f32 %v317
    %vm335 = vweird.f32 %v328
    %vm336 = vmor %vm334, %vm335
    %v337 = vsel %vm336, %v328, %v333
    %v338 = vmul.f32 %v288, %v327
    %v339 = vmul.f32 %v289, %v327
    %v340 = vmul.f32 %v290, %v327
    %v341 = vmul.f32 %v291, %v327
    %v342 = vmul.f32 %v292, %v337
    %v343 = vmul.f32 %v293, %v337
    %v344 = vmul.f32 %v294, %v337
    %v345 = vmul.f32 %v295, %v337
    %v347 = vperm.slane %v266, 0
    %v348 = vperm.slane %v266, 1
    %v349 = vperm.slane %v266, 2
    %v350 = vperm.slane %v266, 3
    %v355 = vmul.f32 %v338, %v347
    %v356 = vmul.f32 %v339, %v348
    %v357 = vmul.f32 %v340, %v349
    %v358 = vmul.f32 %v341, %v350
    %v359 = vmul.f32 %v342, %v347
    %v360 = vmul.f32 %v343, %v348
    %v361 = vmul.f32 %v344, %v349
    %v362 = vmul.f32 %v345, %v350
    %v364 = vperm.slane %v268, 0
    %v365 = vperm.slane %v268, 1
    %v366 = vperm.slane %v268, 2
    %v367 = vperm.slane %v268, 3
    %v372 = vadd.f32 %v355, %v364
    %v373 = vadd.f32 %v356, %v365
    %v374 = vadd.f32 %v357, %v366
    %v375 = vadd.f32 %v358, %v367
    %v376 = vadd.f32 %v359, %v364
    %v377 = vadd.f32 %v360, %v365
    %v378 = vadd.f32 %v361, %v366
    %v379 = vadd.f32 %v362, %v367
    %v380 = vmul.f32 %v372, 0.1
    %v381 = vmul.f32 %v373, 0.1
    %v382 = vmul.f32 %v374, 0.1
    %v383 = vmul.f32 %v375, 0.1
    %v384 = vmul.f32 %v376, 0.1
    %v385 = vmul.f32 %v377, 0.1
    %v386 = vmul.f32 %v378, 0.1
    %v387 = vmul.f32 %v379, 0.1
    %v388 = vmax.f32 %v372, %v380
    %v389 = vmax.f32 %v373, %v381
    %v390 = vmax.f32 %v374, %v382
    %v391 = vmax.f32 %v375, %v383
    %v392 = vmax.f32 %v376, %v384
    %v393 = vmax.f32 %v377, %v385
    %v394 = vmax.f32 %v378, %v386
    %v395 = vmax.f32 %v379, %v387
    %v396 = vpack.c.bf16 %v392, %v388
    %v397 = vpack.c.bf16 %v393, %v389
    %v398 = vpack.c.bf16 %v394, %v390
    %v399 = vpack.c.bf16 %v395, %v391
    %v400 = vld [vmem:[#allocation3] sm:$0xff]
    %v401 = vld [vmem:[#allocation3 + $0x8] sm:$0xff]
    %v402 = vld [vmem:[#allocation3 + $0x10] sm:$0xff]
    %v403 = vld [vmem:[#allocation3 + $0x18] sm:$0xff]
    %v404 = vld [vmem:[#allocation3 + $0x20] sm:$0xff]
    %v405 = vld [vmem:[#allocation3 + $0x28] sm:$0xff]
    %v406 = vld [vmem:[#allocation3 + $0x30] sm:$0xff]
    %v407 = vld [vmem:[#allocation3 + $0x38] sm:$0xff]
    %v408 = vld [vmem:[#allocation3 + $0x40] sm:$0xff]
    %v409 = vld [vmem:[#allocation3 + $0x48] sm:$0xff]
    %v410 = vld [vmem:[#allocation3 + $0x50] sm:$0xff]
    %v411 = vld [vmem:[#allocation3 + $0x58] sm:$0xff]
    %v412 = vld [vmem:[#allocation3 + $0x60] sm:$0xff]
    %v413 = vld [vmem:[#allocation3 + $0x68] sm:$0xff]
    %v414 = vld [vmem:[#allocation3 + $0x70] sm:$0xff]
    %v415 = vld [vmem:[#allocation3 + $0x78] sm:$0xff]
    %v416 = vld [vmem:[#allocation3 + $0x80] sm:$0xff]
    %v417 = vld [vmem:[#allocation3 + $0x88] sm:$0xff]
    %v418 = vld [vmem:[#allocation3 + $0x90] sm:$0xff]
    %v419 = vld [vmem:[#allocation3 + $0x98] sm:$0xff]
    %v420 = vld [vmem:[#allocation3 + $0xa0] sm:$0xff]
    %v421 = vld [vmem:[#allocation3 + $0xa8] sm:$0xff]
    %v422 = vld [vmem:[#allocation3 + $0xb0] sm:$0xff]
    %v423 = vld [vmem:[#allocation3 + $0xb8] sm:$0xff]
    %v424 = vld [vmem:[#allocation3 + $0xc0] sm:$0xff]
    %v425 = vld [vmem:[#allocation3 + $0xc8] sm:$0xff]
    %v426 = vld [vmem:[#allocation3 + $0xd0] sm:$0xff]
    %v427 = vld [vmem:[#allocation3 + $0xd8] sm:$0xff]
    %v428 = vld [vmem:[#allocation3 + $0xe0] sm:$0xff]
    %v429 = vld [vmem:[#allocation3 + $0xe8] sm:$0xff]
    %v430 = vld [vmem:[#allocation3 + $0xf0] sm:$0xff]
    %v431 = vld [vmem:[#allocation3 + $0xf8] sm:$0xff]
    %v432 = vld [vmem:[#allocation3 + $0x100] sm:$0xff]
    %v433 = vld [vmem:[#allocation3 + $0x108] sm:$0xff]
    %v434 = vld [vmem:[#allocation3 + $0x110] sm:$0xff]
    %v435 = vld [vmem:[#allocation3 + $0x118] sm:$0xff]
    %v436 = vld [vmem:[#allocation3 + $0x120] sm:$0xff]
    %v437 = vld [vmem:[#allocation3 + $0x128] sm:$0xff]
    %v438 = vld [vmem:[#allocation3 + $0x130] sm:$0xff]
    %v439 = vld [vmem:[#allocation3 + $0x138] sm:$0xff]
    %v440 = vld [vmem:[#allocation3 + $0x140] sm:$0xff]
    %v441 = vld [vmem:[#allocation3 + $0x148] sm:$0xff]
    %v442 = vld [vmem:[#allocation3 + $0x150] sm:$0xff]
    %v443 = vld [vmem:[#allocation3 + $0x158] sm:$0xff]
    %v444 = vld [vmem:[#allocation3 + $0x160] sm:$0xff]
    %v445 = vld [vmem:[#allocation3 + $0x168] sm:$0xff]
    %v446 = vld [vmem:[#allocation3 + $0x170] sm:$0xff]
    %v447 = vld [vmem:[#allocation3 + $0x178] sm:$0xff]
    %v448 = vld [vmem:[#allocation3 + $0x180] sm:$0xff]
    %v449 = vld [vmem:[#allocation3 + $0x188] sm:$0xff]
    %v450 = vld [vmem:[#allocation3 + $0x190] sm:$0xff]
    %v451 = vld [vmem:[#allocation3 + $0x198] sm:$0xff]
    %v452 = vld [vmem:[#allocation3 + $0x1a0] sm:$0xff]
    %v453 = vld [vmem:[#allocation3 + $0x1a8] sm:$0xff]
    %v454 = vld [vmem:[#allocation3 + $0x1b0] sm:$0xff]
    %v455 = vld [vmem:[#allocation3 + $0x1b8] sm:$0xff]
    %v456 = vld [vmem:[#allocation3 + $0x1c0] sm:$0xff]
    %v457 = vld [vmem:[#allocation3 + $0x1c8] sm:$0xff]
    %v458 = vld [vmem:[#allocation3 + $0x1d0] sm:$0xff]
    %v459 = vld [vmem:[#allocation3 + $0x1d8] sm:$0xff]
    %v460 = vld [vmem:[#allocation3 + $0x1e0] sm:$0xff]
    %v461 = vld [vmem:[#allocation3 + $0x1e8] sm:$0xff]
    %v462 = vld [vmem:[#allocation3 + $0x1f0] sm:$0xff]
    %v463 = vld [vmem:[#allocation3 + $0x1f8] sm:$0xff]
    %v464 = vld [vmem:[%s5] ss:$4 sm:$0x3]
    %v466 = vperm.slane %v464, 0
    %v467 = vperm.slane %v464, 1
    %v534 = vunpack.c.l.b16 %v400
    %v535 = vunpack.c.h.b16 %v400
    %v536 = vunpack.c.l.b16 %v401
    %v537 = vunpack.c.h.b16 %v401
    %v538 = vunpack.c.l.b16 %v402
    %v539 = vunpack.c.h.b16 %v402
    %v540 = vunpack.c.l.b16 %v403
    %v541 = vunpack.c.h.b16 %v403
    %v542 = vunpack.c.l.b16 %v404
    %v543 = vunpack.c.h.b16 %v404
    %v544 = vunpack.c.l.b16 %v405
    %v545 = vunpack.c.h.b16 %v405
    %v546 = vunpack.c.l.b16 %v406
    %v547 = vunpack.c.h.b16 %v406
    %v548 = vunpack.c.l.b16 %v407
    %v549 = vunpack.c.h.b16 %v407
    %v550 = vunpack.c.l.b16 %v408
    %v551 = vunpack.c.h.b16 %v408
    %v552 = vunpack.c.l.b16 %v409
    %v553 = vunpack.c.h.b16 %v409
    %v554 = vunpack.c.l.b16 %v410
    %v555 = vunpack.c.h.b16 %v410
    %v556 = vunpack.c.l.b16 %v411
    %v557 = vunpack.c.h.b16 %v411
    %v558 = vunpack.c.l.b16 %v412
    %v559 = vunpack.c.h.b16 %v412
    %v560 = vunpack.c.l.b16 %v413
    %v561 = vunpack.c.h.b16 %v413
    %v562 = vunpack.c.l.b16 %v414
    %v563 = vunpack.c.h.b16 %v414
    %v564 = vunpack.c.l.b16 %v415
    %v565 = vunpack.c.h.b16 %v415
    %v566 = vunpack.c.l.b16 %v416
    %v567 = vunpack.c.h.b16 %v416
    %v568 = vunpack.c.l.b16 %v417
    %v569 = vunpack.c.h.b16 %v417
    %v570 = vunpack.c.l.b16 %v418
    %v571 = vunpack.c.h.b16 %v418
    %v572 = vunpack.c.l.b16 %v419
    %v573 = vunpack.c.h.b16 %v419
    %v574 = vunpack.c.l.b16 %v420
    %v575 = vunpack.c.h.b16 %v420
    %v576 = vunpack.c.l.b16 %v421
    %v577 = vunpack.c.h.b16 %v421
    %v578 = vunpack.c.l.b16 %v422
    %v579 = vunpack.c.h.b16 %v422
    %v580 = vunpack.c.l.b16 %v423
    %v581 = vunpack.c.h.b16 %v423
    %v582 = vunpack.c.l.b16 %v424
    %v583 = vunpack.c.h.b16 %v424
    %v584 = vunpack.c.l.b16 %v425
    %v585 = vunpack.c.h.b16 %v425
    %v586 = vunpack.c.l.b16 %v426
    %v587 = vunpack.c.h.b16 %v426
    %v588 = vunpack.c.l.b16 %v427
    %v589 = vunpack.c.h.b16 %v427
    %v590 = vunpack.c.l.b16 %v428
    %v591 = vunpack.c.h.b16 %v428
    %v592 = vunpack.c.l.b16 %v429
    %v593 = vunpack.c.h.b16 %v429
    %v594 = vunpack.c.l.b16 %v430
    %v595 = vunpack.c.h.b16 %v430
    %v596 = vunpack.c.l.b16 %v431
    %v597 = vunpack.c.h.b16 %v431
    %v598 = vunpack.c.l.b16 %v432
    %v599 = vunpack.c.h.b16 %v432
    %v600 = vunpack.c.l.b16 %v433
    %v601 = vunpack.c.h.b16 %v433
    %v602 = vunpack.c.l.b16 %v434
    %v603 = vunpack.c.h.b16 %v434
    %v604 = vunpack.c.l.b16 %v435
    %v605 = vunpack.c.h.b16 %v435
    %v606 = vunpack.c.l.b16 %v436
    %v607 = vunpack.c.h.b16 %v436
    %v608 = vunpack.c.l.b16 %v437
    %v609 = vunpack.c.h.b16 %v437
    %v610 = vunpack.c.l.b16 %v438
    %v611 = vunpack.c.h.b16 %v438
    %v612 = vunpack.c.l.b16 %v439
    %v613 = vunpack.c.h.b16 %v439
    %v614 = vunpack.c.l.b16 %v440
    %v615 = vunpack.c.h.b16 %v440
    %v616 = vunpack.c.l.b16 %v441
    %v617 = vunpack.c.h.b16 %v441
    %v618 = vunpack.c.l.b16 %v442
    %v619 = vunpack.c.h.b16 %v442
    %v620 = vunpack.c.l.b16 %v443
    %v621 = vunpack.c.h.b16 %v443
    %v622 = vunpack.c.l.b16 %v444
    %v623 = vunpack.c.h.b16 %v444
    %v624 = vunpack.c.l.b16 %v445
    %v625 = vunpack.c.h.b16 %v445
    %v626 = vunpack.c.l.b16 %v446
    %v627 = vunpack.c.h.b16 %v446
    %v628 = vunpack.c.l.b16 %v447
    %v629 = vunpack.c.h.b16 %v447
    %v630 = vunpack.c.l.b16 %v448
    %v631 = vunpack.c.h.b16 %v448
    %v632 = vunpack.c.l.b16 %v449
    %v633 = vunpack.c.h.b16 %v449
    %v634 = vunpack.c.l.b16 %v450
    %v635 = vunpack.c.h.b16 %v450
    %v636 = vunpack.c.l.b16 %v451
    %v637 = vunpack.c.h.b16 %v451
    %v638 = vunpack.c.l.b16 %v452
    %v639 = vunpack.c.h.b16 %v452
    %v640 = vunpack.c.l.b16 %v453
    %v641 = vunpack.c.h.b16 %v453
    %v642 = vunpack.c.l.b16 %v454
    %v643 = vunpack.c.h.b16 %v454
    %v644 = vunpack.c.l.b16 %v455
    %v645 = vunpack.c.h.b16 %v455
    %v646 = vunpack.c.l.b16 %v456
    %v647 = vunpack.c.h.b16 %v456
    %v648 = vunpack.c.l.b16 %v457
    %v649 = vunpack.c.h.b16 %v457
    %v650 = vunpack.c.l.b16 %v458
    %v651 = vunpack.c.h.b16 %v458
    %v652 = vunpack.c.l.b16 %v459
    %v653 = vunpack.c.h.b16 %v459
    %v654 = vunpack.c.l.b16 %v460
    %v655 = vunpack.c.h.b16 %v460
    %v656 = vunpack.c.l.b16 %v461
    %v657 = vunpack.c.h.b16 %v461
    %v658 = vunpack.c.l.b16 %v462
    %v659 = vunpack.c.h.b16 %v462
    %v660 = vunpack.c.l.b16 %v463
    %v661 = vunpack.c.h.b16 %v463
    %v662 = vpack.c.b16 %v536, %v534
    %v663 = vpack.c.b16 %v537, %v535
    %v664 = vpack.c.b16 %v540, %v538
    %v665 = vpack.c.b16 %v541, %v539
    %v666 = vpack.c.b16 %v544, %v542
    %v667 = vpack.c.b16 %v545, %v543
    %v668 = vpack.c.b16 %v548, %v546
    %v669 = vpack.c.b16 %v549, %v547
    %v670 = vpack.c.b16 %v552, %v550
    %v671 = vpack.c.b16 %v553, %v551
    %v672 = vpack.c.b16 %v556, %v554
    %v673 = vpack.c.b16 %v557, %v555
    %v674 = vpack.c.b16 %v560, %v558
    %v675 = vpack.c.b16 %v561, %v559
    %v676 = vpack.c.b16 %v564, %v562
    %v677 = vpack.c.b16 %v565, %v563
    %v678 = vpack.c.b16 %v568, %v566
    %v679 = vpack.c.b16 %v569, %v567
    %v680 = vpack.c.b16 %v572, %v570
    %v681 = vpack.c.b16 %v573, %v571
    %v682 = vpack.c.b16 %v576, %v574
    %v683 = vpack.c.b16 %v577, %v575
    %v684 = vpack.c.b16 %v580, %v578
    %v685 = vpack.c.b16 %v581, %v579
    %v686 = vpack.c.b16 %v584, %v582
    %v687 = vpack.c.b16 %v585, %v583
    %v688 = vpack.c.b16 %v588, %v586
    %v689 = vpack.c.b16 %v589, %v587
    %v690 = vpack.c.b16 %v592, %v590
    %v691 = vpack.c.b16 %v593, %v591
    %v692 = vpack.c.b16 %v596, %v594
    %v693 = vpack.c.b16 %v597, %v595
    %v694 = vpack.c.b16 %v600, %v598
    %v695 = vpack.c.b16 %v601, %v599
    %v696 = vpack.c.b16 %v604, %v602
    %v697 = vpack.c.b16 %v605, %v603
    %v698 = vpack.c.b16 %v608, %v606
    %v699 = vpack.c.b16 %v609, %v607
    %v700 = vpack.c.b16 %v612, %v610
    %v701 = vpack.c.b16 %v613, %v611
    %v702 = vpack.c.b16 %v616, %v614
    %v703 = vpack.c.b16 %v617, %v615
    %v704 = vpack.c.b16 %v620, %v618
    %v705 = vpack.c.b16 %v621, %v619
    %v706 = vpack.c.b16 %v624, %v622
    %v707 = vpack.c.b16 %v625, %v623
    %v708 = vpack.c.b16 %v628, %v626
    %v709 = vpack.c.b16 %v629, %v627
    %v710 = vpack.c.b16 %v632, %v630
    %v711 = vpack.c.b16 %v633, %v631
    %v712 = vpack.c.b16 %v636, %v634
    %v713 = vpack.c.b16 %v637, %v635
    %v714 = vpack.c.b16 %v640, %v638
    %v715 = vpack.c.b16 %v641, %v639
    %v716 = vpack.c.b16 %v644, %v642
    %v717 = vpack.c.b16 %v645, %v643
    %v718 = vpack.c.b16 %v648, %v646
    %v719 = vpack.c.b16 %v649, %v647
    %v720 = vpack.c.b16 %v652, %v650
    %v721 = vpack.c.b16 %v653, %v651
    %v722 = vpack.c.b16 %v656, %v654
    %v723 = vpack.c.b16 %v657, %v655
    %v724 = vpack.c.b16 %v660, %v658
    %v725 = vpack.c.b16 %v661, %v659
    %790 = vmatpush.bf16.msra.mxu0 %v676
    %791 = vmatpush.bf16.msra.mxu0 %v674
    %792 = vmatpush.bf16.msra.mxu0 %v672
    %793 = vmatpush.bf16.msra.mxu0 %v670
    %794 = vmatpush.bf16.msra.mxu0 %v668
    %795 = vmatpush.bf16.msra.mxu0 %v666
    %796 = vmatpush.bf16.msra.mxu0 %v664
    %797 = vmatpush.bf16.msra.mxu0 %v662
    %798 = vmatmul.bf16.gmra.mxu0 %v396
    %v799 = vpop.f32.mrf.mxu0
    %v800 = vadd.f32 %v466, %v799
    %v801 = vpop.f32.mrf.mxu0
    %v802 = vadd.f32 %v466, %v801
    %803 = vdwg.mxu0
    %804 = vmatpush.bf16.msra.mxu0 %v692
    %805 = vmatpush.bf16.msra.mxu0 %v690
    %806 = vmatpush.bf16.msra.mxu0 %v688
    %807 = vmatpush.bf16.msra.mxu0 %v686
    %808 = vmatpush.bf16.msra.mxu0 %v684
    %809 = vmatpush.bf16.msra.mxu0 %v682
    %810 = vmatpush.bf16.msra.mxu0 %v680
    %811 = vmatpush.bf16.msra.mxu0 %v678
    %812 = vmatmul.bf16.gmra.mxu0 %v397
    %v813 = vpop.f32.mrf.mxu0
    %v814 = vadd.f32 %v800, %v813
    %v815 = vpop.f32.mrf.mxu0
    %v816 = vadd.f32 %v802, %v815
    %817 = vdwg.mxu0
    %818 = vmatpush.bf16.msra.mxu0 %v708
    %819 = vmatpush.bf16.msra.mxu0 %v706
    %820 = vmatpush.bf16.msra.mxu0 %v704
    %821 = vmatpush.bf16.msra.mxu0 %v702
    %822 = vmatpush.bf16.msra.mxu0 %v700
    %823 = vmatpush.bf16.msra.mxu0 %v698
    %824 = vmatpush.bf16.msra.mxu0 %v696
    %825 = vmatpush.bf16.msra.mxu0 %v694
    %826 = vmatmul.bf16.gmra.mxu0 %v398
    %v827 = vpop.f32.mrf.mxu0
    %v828 = vadd.f32 %v814, %v827
    %v829 = vpop.f32.mrf.mxu0
    %v830 = vadd.f32 %v816, %v829
    %831 = vdwg.mxu0
    %832 = vmatpush.bf16.msra.mxu0 %v724
    %833 = vmatpush.bf16.msra.mxu0 %v722
    %834 = vmatpush.bf16.msra.mxu0 %v720
    %835 = vmatpush.bf16.msra.mxu0 %v718
    %836 = vmatpush.bf16.msra.mxu0 %v716
    %837 = vmatpush.bf16.msra.mxu0 %v714
    %838 = vmatpush.bf16.msra.mxu0 %v712
    %839 = vmatpush.bf16.msra.mxu0 %v710
    %840 = vmatmul.bf16.gmra.mxu0 %v399
    %v841 = vpop.f32.mrf.mxu0
    %v842 = vadd.f32 %v828, %v841
    %v843 = vpop.f32.mrf.mxu0
    %v844 = vadd.f32 %v830, %v843
    %845 = vdwg.mxu0
    %846 = vmatpush.bf16.msra.mxu0 %v677
    %847 = vmatpush.bf16.msra.mxu0 %v675
    %848 = vmatpush.bf16.msra.mxu0 %v673
    %849 = vmatpush.bf16.msra.mxu0 %v671
    %850 = vmatpush.bf16.msra.mxu0 %v669
    %851 = vmatpush.bf16.msra.mxu0 %v667
    %852 = vmatpush.bf16.msra.mxu0 %v665
    %853 = vmatpush.bf16.msra.mxu0 %v663
    %854 = vmatmul.bf16.gmra.mxu0 %v396
    %v855 = vpop.f32.mrf.mxu0
    %v856 = vadd.f32 %v467, %v855
    %v857 = vpop.f32.mrf.mxu0
    %v858 = vadd.f32 %v467, %v857
    %859 = vdwg.mxu0
    %860 = vmatpush.bf16.msra.mxu0 %v693
    %861 = vmatpush.bf16.msra.mxu0 %v691
    %862 = vmatpush.bf16.msra.mxu0 %v689
    %863 = vmatpush.bf16.msra.mxu0 %v687
    %864 = vmatpush.bf16.msra.mxu0 %v685
    %865 = vmatpush.bf16.msra.mxu0 %v683
    %866 = vmatpush.bf16.msra.mxu0 %v681
    %867 = vmatpush.bf16.msra.mxu0 %v679
    %868 = vmatmul.bf16.gmra.mxu0 %v397
    %v869 = vpop.f32.mrf.mxu0
    %v870 = vadd.f32 %v856, %v869
    %v871 = vpop.f32.mrf.mxu0
    %v872 = vadd.f32 %v858, %v871
    %873 = vdwg.mxu0
    %874 = vmatpush.bf16.msra.mxu0 %v709
    %875 = vmatpush.bf16.msra.mxu0 %v707
    %876 = vmatpush.bf16.msra.mxu0 %v705
    %877 = vmatpush.bf16.msra.mxu0 %v703
    %878 = vmatpush.bf16.msra.mxu0 %v701
    %879 = vmatpush.bf16.msra.mxu0 %v699
    %880 = vmatpush.bf16.msra.mxu0 %v697
    %881 = vmatpush.bf16.msra.mxu0 %v695
    %882 = vmatmul.bf16.gmra.mxu0 %v398
    %v883 = vpop.f32.mrf.mxu0
    %v884 = vadd.f32 %v870, %v883
    %v885 = vpop.f32.mrf.mxu0
    %v886 = vadd.f32 %v872, %v885
    %887 = vdwg.mxu0
    %888 = vmatpush.bf16.msra.mxu0 %v725
    %889 = vmatpush.bf16.msra.mxu0 %v723
    %890 = vmatpush.bf16.msra.mxu0 %v721
    %891 = vmatpush.bf16.msra.mxu0 %v719
    %892 = vmatpush.bf16.msra.mxu0 %v717
    %893 = vmatpush.bf16.msra.mxu0 %v715
    %894 = vmatpush.bf16.msra.mxu0 %v713
    %895 = vmatpush.bf16.msra.mxu0 %v711
    %896 = vmatmul.bf16.gmra.mxu0 %v399
    %v897 = vpop.f32.mrf.mxu0
    %v898 = vadd.f32 %v884, %v897
    %v899 = vpop.f32.mrf.mxu0
    %v900 = vadd.f32 %v886, %v899
    %901 = vdwg.mxu0
    %s902 = scalar_lea.vmem %s5, 1
    %v903 = vld [vmem:[%s902] ss:$4 sm:$0x3]
    %s904 = scalar_lea.vmem %s5, 2
    %v905 = vld [vmem:[%s904] ss:$4 sm:$0x3]
    %v906 = vadd.f32 %v842, %v898
    %907 = vadd.xlane.f32.xlu0 %v906
    %v908 = vpop.xlane.xlu0 %907
    %v909 = vadd.f32 %v844, %v900
    %910 = vadd.xlane.f32.xlu0 %v909
    %v911 = vpop.xlane.xlu0 %910
    %v912 = vrcp.pop 256.0
    %v913 = vmul.f32 256.0, %v912
    %v914 = vsub.f32 1.0, %v913
    %v915 = vmul.f32 %v912, %v914
    %v916 = vadd.f32 %v912, %v915
    %vm917 = vweird.f32 %v912
    %v918 = vsel %vm917, %v912, %v916
    %v919 = vmul.f32 %v908, %v918
    %v920 = vmul.f32 %v911, %v918
    %v921 = vsub.f32 %v842, %v919
    %v922 = vsub.f32 %v898, %v919
    %v923 = vsub.f32 %v844, %v920
    %v924 = vsub.f32 %v900, %v920
    %v925 = vmul.f32 %v921, %v921
    %v926 = vmul.f32 %v922, %v922
    %v927 = vmul.f32 %v923, %v923
    %v928 = vmul.f32 %v924, %v924
    %v929 = vadd.f32 %v925, %v926
    %930 = vadd.xlane.f32.xlu0 %v929
    %v931 = vpop.xlane.xlu0 %930
    %v932 = vadd.f32 %v927, %v928
    %933 = vadd.xlane.f32.xlu0 %v932
    %v934 = vpop.xlane.xlu0 %933
    %v935 = vmul.f32 %v931, %v918
    %v936 = vmul.f32 %v934, %v918
    %v937 = vadd.f32 %v935, 1e-05
    %v938 = vadd.f32 %v936, 1e-05
    %v939 = vrsqrt.pop %v937
    %v940 = vmul.f32 %v939, %v937
    %v941 = vmul.f32 %v940, %v939
    %v942 = vmul.f32 0.5, %v941
    %v943 = vsub.f32 1.5, %v942
    %v944 = vmul.f32 %v939, %v943
    %vm945 = vweird.f32 %v937
    %vm946 = vweird.f32 %v939
    %vm947 = vmor %vm945, %vm946
    %v948 = vsel %vm947, %v939, %v944
    %v949 = vrsqrt.pop %v938
    %v950 = vmul.f32 %v949, %v938
    %v951 = vmul.f32 %v950, %v949
    %v952 = vmul.f32 0.5, %v951
    %v953 = vsub.f32 1.5, %v952
    %v954 = vmul.f32 %v949, %v953
    %vm955 = vweird.f32 %v938
    %vm956 = vweird.f32 %v949
    %vm957 = vmor %vm955, %vm956
    %v958 = vsel %vm957, %v949, %v954
    %v959 = vmul.f32 %v921, %v948
    %v960 = vmul.f32 %v922, %v948
    %v961 = vmul.f32 %v923, %v958
    %v962 = vmul.f32 %v924, %v958
    %v964 = vperm.slane %v903, 0
    %v965 = vperm.slane %v903, 1
    %v968 = vmul.f32 %v959, %v964
    %v969 = vmul.f32 %v960, %v965
    %v970 = vmul.f32 %v961, %v964
    %v971 = vmul.f32 %v962, %v965
    %v973 = vperm.slane %v905, 0
    %v974 = vperm.slane %v905, 1
    %v977 = vadd.f32 %v968, %v973
    %v978 = vadd.f32 %v969, %v974
    %v979 = vadd.f32 %v970, %v973
    %v980 = vadd.f32 %v971, %v974
    %v981 = vmul.f32 %v977, 0.1
    %v982 = vmul.f32 %v978, 0.1
    %v983 = vmul.f32 %v979, 0.1
    %v984 = vmul.f32 %v980, 0.1
    %v985 = vmax.f32 %v977, %v981
    %v986 = vmax.f32 %v978, %v982
    %v987 = vmax.f32 %v979, %v983
    %v988 = vmax.f32 %v980, %v984
    %v989 = vpack.c.bf16 %v987, %v985
    %v990 = vpack.c.bf16 %v988, %v986
    %v991 = vld [vmem:[%s6] sm:$0xf]
    %v992 = vld [vmem:[%s6 + $0x4] sm:$0xf]
    %v993 = vld [vmem:[%s6 + $0x8] sm:$0xf]
    %v994 = vld [vmem:[%s6 + $0xc] sm:$0xf]
    %v995 = vld [vmem:[%s6 + $0x10] sm:$0xf]
    %v996 = vld [vmem:[%s6 + $0x14] sm:$0xf]
    %v997 = vld [vmem:[%s6 + $0x18] sm:$0xf]
    %v998 = vld [vmem:[%s6 + $0x1c] sm:$0xf]
    %v999 = vld [vmem:[%s6 + $0x20] sm:$0xf]
    %v1000 = vld [vmem:[%s6 + $0x24] sm:$0xf]
    %v1001 = vld [vmem:[%s6 + $0x28] sm:$0xf]
    %v1002 = vld [vmem:[%s6 + $0x2c] sm:$0xf]
    %v1003 = vld [vmem:[%s6 + $0x30] sm:$0xf]
    %v1004 = vld [vmem:[%s6 + $0x34] sm:$0xf]
    %v1005 = vld [vmem:[%s6 + $0x38] sm:$0xf]
    %v1006 = vld [vmem:[%s6 + $0x3c] sm:$0xf]
    %v1007 = vld [vmem:[%s6 + $0x40] sm:$0xf]
    %v1008 = vld [vmem:[%s6 + $0x44] sm:$0xf]
    %v1009 = vld [vmem:[%s6 + $0x48] sm:$0xf]
    %v1010 = vld [vmem:[%s6 + $0x4c] sm:$0xf]
    %v1011 = vld [vmem:[%s6 + $0x50] sm:$0xf]
    %v1012 = vld [vmem:[%s6 + $0x54] sm:$0xf]
    %v1013 = vld [vmem:[%s6 + $0x58] sm:$0xf]
    %v1014 = vld [vmem:[%s6 + $0x5c] sm:$0xf]
    %v1015 = vld [vmem:[%s6 + $0x60] sm:$0xf]
    %v1016 = vld [vmem:[%s6 + $0x64] sm:$0xf]
    %v1017 = vld [vmem:[%s6 + $0x68] sm:$0xf]
    %v1018 = vld [vmem:[%s6 + $0x6c] sm:$0xf]
    %v1019 = vld [vmem:[%s6 + $0x70] sm:$0xf]
    %v1020 = vld [vmem:[%s6 + $0x74] sm:$0xf]
    %v1021 = vld [vmem:[%s6 + $0x78] sm:$0xf]
    %v1022 = vld [vmem:[%s6 + $0x7c] sm:$0xf]
    %v1023 = vld [vmem:[%s7] sm:$0x1]
    %v1024 = vperm.slane %v1023, 0
    %v1057 = vunpack.c.l.b16 %v991
    %v1058 = vunpack.c.l.b16 %v992
    %v1059 = vunpack.c.l.b16 %v993
    %v1060 = vunpack.c.l.b16 %v994
    %v1061 = vunpack.c.l.b16 %v995
    %v1062 = vunpack.c.l.b16 %v996
    %v1063 = vunpack.c.l.b16 %v997
    %v1064 = vunpack.c.l.b16 %v998
    %v1065 = vunpack.c.l.b16 %v999
    %v1066 = vunpack.c.l.b16 %v1000
    %v1067 = vunpack.c.l.b16 %v1001
    %v1068 = vunpack.c.l.b16 %v1002
    %v1069 = vunpack.c.l.b16 %v1003
    %v1070 = vunpack.c.l.b16 %v1004
    %v1071 = vunpack.c.l.b16 %v1005
    %v1072 = vunpack.c.l.b16 %v1006
    %v1073 = vunpack.c.l.b16 %v1007
    %v1074 = vunpack.c.l.b16 %v1008
    %v1075 = vunpack.c.l.b16 %v1009
    %v1076 = vunpack.c.l.b16 %v1010
    %v1077 = vunpack.c.l.b16 %v1011
    %v1078 = vunpack.c.l.b16 %v1012
    %v1079 = vunpack.c.l.b16 %v1013
    %v1080 = vunpack.c.l.b16 %v1014
    %v1081 = vunpack.c.l.b16 %v1015
    %v1082 = vunpack.c.l.b16 %v1016
    %v1083 = vunpack.c.l.b16 %v1017
    %v1084 = vunpack.c.l.b16 %v1018
    %v1085 = vunpack.c.l.b16 %v1019
    %v1086 = vunpack.c.l.b16 %v1020
    %v1087 = vunpack.c.l.b16 %v1021
    %v1088 = vunpack.c.l.b16 %v1022
    %v1089 = vpack.c.b16 %v1058, %v1057
    %v1090 = vpack.c.b16 %v1060, %v1059
    %v1091 = vpack.c.b16 %v1062, %v1061
    %v1092 = vpack.c.b16 %v1064, %v1063
    %v1093 = vpack.c.b16 %v1066, %v1065
    %v1094 = vpack.c.b16 %v1068, %v1067
    %v1095 = vpack.c.b16 %v1070, %v1069
    %v1096 = vpack.c.b16 %v1072, %v1071
    %v1097 = vpack.c.b16 %v1074, %v1073
    %v1098 = vpack.c.b16 %v1076, %v1075
    %v1099 = vpack.c.b16 %v1078, %v1077
    %v1100 = vpack.c.b16 %v1080, %v1079
    %v1101 = vpack.c.b16 %v1082, %v1081
    %v1102 = vpack.c.b16 %v1084, %v1083
    %v1103 = vpack.c.b16 %v1086, %v1085
    %v1104 = vpack.c.b16 %v1088, %v1087
    %1121 = vmatpush.bf16.msra.mxu0 %v1096
    %1122 = vmatpush.bf16.msra.mxu0 %v1095
    %1123 = vmatpush.bf16.msra.mxu0 %v1094
    %1124 = vmatpush.bf16.msra.mxu0 %v1093
    %1125 = vmatpush.bf16.msra.mxu0 %v1092
    %1126 = vmatpush.bf16.msra.mxu0 %v1091
    %1127 = vmatpush.bf16.msra.mxu0 %v1090
    %1128 = vmatpush.bf16.msra.mxu0 %v1089
    %1129 = vmatmul.bf16.gmra.mxu0 %v989
    %v1130 = vpop.f32.mrf.mxu0
    %v1131 = vadd.f32 %v1024, %v1130
    %v1132 = vpop.f32.mrf.mxu0
    %v1133 = vadd.f32 %v1024, %v1132
    %1134 = vdwg.mxu0
    %1135 = vmatpush.bf16.msra.mxu0 %v1104
    %1136 = vmatpush.bf16.msra.mxu0 %v1103
    %1137 = vmatpush.bf16.msra.mxu0 %v1102
    %1138 = vmatpush.bf16.msra.mxu0 %v1101
    %1139 = vmatpush.bf16.msra.mxu0 %v1100
    %1140 = vmatpush.bf16.msra.mxu0 %v1099
    %1141 = vmatpush.bf16.msra.mxu0 %v1098
    %1142 = vmatpush.bf16.msra.mxu0 %v1097
    %1143 = vmatmul.bf16.gmra.mxu0 %v990
    %v1144 = vpop.f32.mrf.mxu0
    %v1145 = vadd.f32 %v1131, %v1144
    %v1146 = vpop.f32.mrf.mxu0
    %v1147 = vadd.f32 %v1133, %v1146
    %1148 = vdwg.mxu0
    %v1149 = vld [vmem:[%s7 + $0x1] sm:$0x1]
    %v1150 = vld [vmem:[%s7 + $0x2] sm:$0x1]
    %1151 = vadd.xlane.f32.xlu0 %v1145
    %v1152 = vpop.xlane.xlu0 %1151
    %1153 = vadd.xlane.f32.xlu0 %v1147
    %v1154 = vpop.xlane.xlu0 %1153
    %v1155 = vrcp.pop 128.0
    %v1156 = vmul.f32 128.0, %v1155
    %v1157 = vsub.f32 1.0, %v1156
    %v1158 = vmul.f32 %v1155, %v1157
    %v1159 = vadd.f32 %v1155, %v1158
    %vm1160 = vweird.f32 %v1155
    %v1161 = vsel %vm1160, %v1155, %v1159
    %v1162 = vmul.f32 %v1152, %v1161
    %v1163 = vmul.f32 %v1154, %v1161
    %v1164 = vsub.f32 %v1145, %v1162
    %v1165 = vsub.f32 %v1147, %v1163
    %v1166 = vmul.f32 %v1164, %v1164
    %v1167 = vmul.f32 %v1165, %v1165
    %1168 = vadd.xlane.f32.xlu0 %v1166
    %v1169 = vpop.xlane.xlu0 %1168
    %1170 = vadd.xlane.f32.xlu0 %v1167
    %v1171 = vpop.xlane.xlu0 %1170
    %v1172 = vmul.f32 %v1169, %v1161
    %v1173 = vmul.f32 %v1171, %v1161
    %v1174 = vadd.f32 %v1172, 1e-05
    %v1175 = vadd.f32 %v1173, 1e-05
    %v1176 = vrsqrt.pop %v1174
    %v1177 = vmul.f32 %v1176, %v1174
    %v1178 = vmul.f32 %v1177, %v1176
    %v1179 = vmul.f32 0.5, %v1178
    %v1180 = vsub.f32 1.5, %v1179
    %v1181 = vmul.f32 %v1176, %v1180
    %vm1182 = vweird.f32 %v1174
    %vm1183 = vweird.f32 %v1176
    %vm1184 = vmor %vm1182, %vm1183
    %v1185 = vsel %vm1184, %v1176, %v1181
    %v1186 = vrsqrt.pop %v1175
    %v1187 = vmul.f32 %v1186, %v1175
    %v1188 = vmul.f32 %v1187, %v1186
    %v1189 = vmul.f32 0.5, %v1188
    %v1190 = vsub.f32 1.5, %v1189
    %v1191 = vmul.f32 %v1186, %v1190
    %vm1192 = vweird.f32 %v1175
    %vm1193 = vweird.f32 %v1186
    %vm1194 = vmor %vm1192, %vm1193
    %v1195 = vsel %vm1194, %v1186, %v1191
    %v1196 = vmul.f32 %v1164, %v1185
    %v1197 = vmul.f32 %v1165, %v1195
    %v1198 = vperm.slane %v1149, 0
    %v1199 = vmul.f32 %v1196, %v1198
    %v1200 = vmul.f32 %v1197, %v1198
    %v1201 = vperm.slane %v1150, 0
    %v1202 = vadd.f32 %v1199, %v1201
    %v1203 = vadd.f32 %v1200, %v1201
    %v1204 = vmul.f32 %v1202, 0.1
    %v1205 = vmul.f32 %v1203, 0.1
    %v1206 = vmax.f32 %v1202, %v1204
    %v1207 = vmax.f32 %v1203, %v1205
    %v1208 = vpack.c.bf16 %v1207, %v1206
    %v1209 = vld [vmem:[%s8] sm:$0xff]
    %v1210 = vld [vmem:[%s8 + $0x8] sm:$0xff]
    %v1211 = vld [vmem:[%s8 + $0x10] sm:$0xff]
    %v1212 = vld [vmem:[%s8 + $0x18] sm:$0xff]
    %v1213 = vld [vmem:[%s8 + $0x20] sm:$0xff]
    %v1214 = vld [vmem:[%s8 + $0x28] sm:$0xff]
    %v1215 = vld [vmem:[%s8 + $0x30] sm:$0xff]
    %v1216 = vld [vmem:[%s8 + $0x38] sm:$0xff]
    %v1217 = vld [vmem:[%s8 + $0x40] sm:$0xff]
    %v1218 = vld [vmem:[%s8 + $0x48] sm:$0xff]
    %v1219 = vld [vmem:[%s8 + $0x50] sm:$0xff]
    %v1220 = vld [vmem:[%s8 + $0x58] sm:$0xff]
    %v1221 = vld [vmem:[%s8 + $0x60] sm:$0xff]
    %v1222 = vld [vmem:[%s8 + $0x68] sm:$0xff]
    %v1223 = vld [vmem:[%s8 + $0x70] sm:$0xff]
    %v1224 = vld [vmem:[%s8 + $0x78] sm:$0xff]
    %v1225 = vld [vmem:[%s9] sm:$0x3]
    %v1227 = vperm.slane %v1225, 0
    %v1228 = vperm.slane %v1225, 1
    %v1247 = vunpack.c.l.b16 %v1209
    %v1248 = vunpack.c.h.b16 %v1209
    %v1249 = vunpack.c.l.b16 %v1210
    %v1250 = vunpack.c.h.b16 %v1210
    %v1251 = vunpack.c.l.b16 %v1211
    %v1252 = vunpack.c.h.b16 %v1211
    %v1253 = vunpack.c.l.b16 %v1212
    %v1254 = vunpack.c.h.b16 %v1212
    %v1255 = vunpack.c.l.b16 %v1213
    %v1256 = vunpack.c.h.b16 %v1213
    %v1257 = vunpack.c.l.b16 %v1214
    %v1258 = vunpack.c.h.b16 %v1214
    %v1259 = vunpack.c.l.b16 %v1215
    %v1260 = vunpack.c.h.b16 %v1215
    %v1261 = vunpack.c.l.b16 %v1216
    %v1262 = vunpack.c.h.b16 %v1216
    %v1263 = vunpack.c.l.b16 %v1217
    %v1264 = vunpack.c.h.b16 %v1217
    %v1265 = vunpack.c.l.b16 %v1218
    %v1266 = vunpack.c.h.b16 %v1218
    %v1267 = vunpack.c.l.b16 %v1219
    %v1268 = vunpack.c.h.b16 %v1219
    %v1269 = vunpack.c.l.b16 %v1220
    %v1270 = vunpack.c.h.b16 %v1220
    %v1271 = vunpack.c.l.b16 %v1221
    %v1272 = vunpack.c.h.b16 %v1221
    %v1273 = vunpack.c.l.b16 %v1222
    %v1274 = vunpack.c.h.b16 %v1222
    %v1275 = vunpack.c.l.b16 %v1223
    %v1276 = vunpack.c.h.b16 %v1223
    %v1277 = vunpack.c.l.b16 %v1224
    %v1278 = vunpack.c.h.b16 %v1224
    %v1279 = vpack.c.b16 %v1249, %v1247
    %v1280 = vpack.c.b16 %v1250, %v1248
    %v1281 = vpack.c.b16 %v1253, %v1251
    %v1282 = vpack.c.b16 %v1254, %v1252
    %v1283 = vpack.c.b16 %v1257, %v1255
    %v1284 = vpack.c.b16 %v1258, %v1256
    %v1285 = vpack.c.b16 %v1261, %v1259
    %v1286 = vpack.c.b16 %v1262, %v1260
    %v1287 = vpack.c.b16 %v1265, %v1263
    %v1288 = vpack.c.b16 %v1266, %v1264
    %v1289 = vpack.c.b16 %v1269, %v1267
    %v1290 = vpack.c.b16 %v1270, %v1268
    %v1291 = vpack.c.b16 %v1273, %v1271
    %v1292 = vpack.c.b16 %v1274, %v1272
    %v1293 = vpack.c.b16 %v1277, %v1275
    %v1294 = vpack.c.b16 %v1278, %v1276
    %1311 = vmatpush.bf16.msra.mxu0 %v1293
    %1312 = vmatpush.bf16.msra.mxu0 %v1291
    %1313 = vmatpush.bf16.msra.mxu0 %v1289
    %1314 = vmatpush.bf16.msra.mxu0 %v1287
    %1315 = vmatpush.bf16.msra.mxu0 %v1285
    %1316 = vmatpush.bf16.msra.mxu0 %v1283
    %1317 = vmatpush.bf16.msra.mxu0 %v1281
    %1318 = vmatpush.bf16.msra.mxu0 %v1279
    %1319 = vmatmul.bf16.gmra.mxu0 %v1208
    %v1320 = vpop.f32.mrf.mxu0
    %v1321 = vadd.f32 %v1227, %v1320
    %v1322 = vpop.f32.mrf.mxu0
    %v1323 = vadd.f32 %v1227, %v1322
    %1324 = vdwg.mxu0
    %1325 = vmatpush.bf16.msra.mxu0 %v1294
    %1326 = vmatpush.bf16.msra.mxu0 %v1292
    %1327 = vmatpush.bf16.msra.mxu0 %v1290
    %1328 = vmatpush.bf16.msra.mxu0 %v1288
    %1329 = vmatpush.bf16.msra.mxu0 %v1286
    %1330 = vmatpush.bf16.msra.mxu0 %v1284
    %1331 = vmatpush.bf16.msra.mxu0 %v1282
    %1332 = vmatpush.bf16.msra.mxu0 %v1280
    %1333 = vmatmul.bf16.gmra.mxu0 %v1208
    %v1334 = vpop.f32.mrf.mxu0
    %v1335 = vadd.f32 %v1228, %v1334
    %v1336 = vpop.f32.mrf.mxu0
    %v1337 = vadd.f32 %v1228, %v1336
    %1338 = vdwg.mxu0
    %v1339 = vld [vmem:[%s10] sm:$0x1]
    %v1340 = vld [vmem:[%s10 + $0x1] sm:$0x1]
    %1341 = vadd.xlane.f32.xlu0 %v1321
    %v1342 = vpop.xlane.xlu0 %1341
    %1343 = vadd.xlane.f32.xlu0 %v1323
    %v1344 = vpop.xlane.xlu0 %1343
    %v1345 = vmul.f32 %v1342, %v1161
    %v1346 = vmul.f32 %v1344, %v1161
    %v1347 = vsub.f32 %v1321, %v1345
    %v1348 = vsub.f32 %v1323, %v1346
    %v1349 = vmul.f32 %v1347, %v1347
    %v1350 = vmul.f32 %v1348, %v1348
    %1351 = vadd.xlane.f32.xlu0 %v1349
    %v1352 = vpop.xlane.xlu0 %1351
    %1353 = vadd.xlane.f32.xlu0 %v1350
    %v1354 = vpop.xlane.xlu0 %1353
    %v1355 = vmul.f32 %v1352, %v1161
    %v1356 = vmul.f32 %v1354, %v1161
    %v1357 = vadd.f32 %v1355, 1e-05
    %v1358 = vadd.f32 %v1356, 1e-05
    %v1359 = vrsqrt.pop %v1357
    %v1360 = vmul.f32 %v1359, %v1357
    %v1361 = vmul.f32 %v1360, %v1359
    %v1362 = vmul.f32 0.5, %v1361
    %v1363 = vsub.f32 1.5, %v1362
    %v1364 = vmul.f32 %v1359, %v1363
    %vm1365 = vweird.f32 %v1357
    %vm1366 = vweird.f32 %v1359
    %vm1367 = vmor %vm1365, %vm1366
    %v1368 = vsel %vm1367, %v1359, %v1364
    %v1369 = vrsqrt.pop %v1358
    %v1370 = vmul.f32 %v1369, %v1358
    %v1371 = vmul.f32 %v1370, %v1369
    %v1372 = vmul.f32 0.5, %v1371
    %v1373 = vsub.f32 1.5, %v1372
    %v1374 = vmul.f32 %v1369, %v1373
    %vm1375 = vweird.f32 %v1358
    %vm1376 = vweird.f32 %v1369
    %vm1377 = vmor %vm1375, %vm1376
    %v1378 = vsel %vm1377, %v1369, %v1374
    %v1379 = vmul.f32 %v1347, %v1368
    %v1380 = vmul.f32 %v1348, %v1378
    %v1381 = vperm.slane %v1339, 0
    %v1382 = vmul.f32 %v1379, %v1381
    %v1383 = vmul.f32 %v1380, %v1381
    %v1384 = vperm.slane %v1340, 0
    %v1385 = vadd.f32 %v1382, %v1384
    %v1386 = vadd.f32 %v1383, %v1384
    %v1387 = vmul.f32 %v1385, 0.1
    %v1388 = vmul.f32 %v1386, 0.1
    %v1389 = vmax.f32 %v1385, %v1387
    %v1390 = vmax.f32 %v1386, %v1388
    %v1391 = vld [vmem:[%s11] sm:$0x1]
    %v1392 = vld [vmem:[%s11 + $0x1] sm:$0x1]
    %vm1393 = vcmask 523264
    %v1394 = vsel %vm1393, %v1335, 0.0
    %1395 = vadd.xlane.f32.xlu0 %v1394
    %v1396 = vpop.xlane.xlu0 %1395
    %v1397 = vsel %vm1393, %v1337, 0.0
    %1398 = vadd.xlane.f32.xlu0 %v1397
    %v1399 = vpop.xlane.xlu0 %1398
    %v1400 = vrcp.pop 64.0
    %v1401 = vmul.f32 64.0, %v1400
    %v1402 = vsub.f32 1.0, %v1401
    %v1403 = vmul.f32 %v1400, %v1402
    %v1404 = vadd.f32 %v1400, %v1403
    %vm1405 = vweird.f32 %v1400
    %v1406 = vsel %vm1405, %v1400, %v1404
    %v1407 = vmul.f32 %v1396, %v1406
    %v1408 = vmul.f32 %v1399, %v1406
    %v1409 = vsub.f32 %v1335, %v1407
    %v1410 = vsub.f32 %v1337, %v1408
    %v1411 = vmul.f32 %v1409, %v1409
    %v1412 = vmul.f32 %v1410, %v1410
    %v1413 = vsel %vm1393, %v1411, 0.0
    %1414 = vadd.xlane.f32.xlu0 %v1413
    %v1415 = vpop.xlane.xlu0 %1414
    %v1416 = vsel %vm1393, %v1412, 0.0
    %1417 = vadd.xlane.f32.xlu0 %v1416
    %v1418 = vpop.xlane.xlu0 %1417
    %v1419 = vmul.f32 %v1415, %v1406
    %v1420 = vmul.f32 %v1418, %v1406
    %v1421 = vadd.f32 %v1419, 1e-05
    %v1422 = vadd.f32 %v1420, 1e-05
    %v1423 = vrsqrt.pop %v1421
    %v1424 = vmul.f32 %v1423, %v1421
    %v1425 = vmul.f32 %v1424, %v1423
    %v1426 = vmul.f32 0.5, %v1425
    %v1427 = vsub.f32 1.5, %v1426
    %v1428 = vmul.f32 %v1423, %v1427
    %vm1429 = vweird.f32 %v1421
    %vm1430 = vweird.f32 %v1423
    %vm1431 = vmor %vm1429, %vm1430
    %v1432 = vsel %vm1431, %v1423, %v1428
    %v1433 = vrsqrt.pop %v1422
    %v1434 = vmul.f32 %v1433, %v1422
    %v1435 = vmul.f32 %v1434, %v1433
    %v1436 = vmul.f32 0.5, %v1435
    %v1437 = vsub.f32 1.5, %v1436
    %v1438 = vmul.f32 %v1433, %v1437
    %vm1439 = vweird.f32 %v1422
    %vm1440 = vweird.f32 %v1433
    %vm1441 = vmor %vm1439, %vm1440
    %v1442 = vsel %vm1441, %v1433, %v1438
    %v1443 = vmul.f32 %v1409, %v1432
    %v1444 = vmul.f32 %v1410, %v1442
    %v1445 = vperm.slane %v1391, 0
    %v1446 = vmul.f32 %v1443, %v1445
    %v1447 = vmul.f32 %v1444, %v1445
    %v1448 = vperm.slane %v1392, 0
    %v1449 = vadd.f32 %v1446, %v1448
    %v1450 = vadd.f32 %v1447, %v1448
    %v1451 = vmul.f32 %v1449, 0.1
    %v1452 = vmul.f32 %v1450, 0.1
    %v1453 = vmax.f32 %v1449, %v1451
    %v1454 = vmax.f32 %v1450, %v1452
    %v1455 = vld [vmem:[%s11 + $0x2] sm:$0x1]
    %v1456 = vperm.slane %v1455, 0
    %v1457 = vmul.f32 %v1453, %v1456
    %v1458 = vmul.f32 %v1454, %v1456
    %v1459 = vsel %vm1393, %v1457, 0.0
    %1460 = vadd.xlane.f32.xlu0 %v1459
    %v1461 = vpop.xlane.xlu0 %1460
    %v1462 = vsel %vm1393, %v1458, 0.0
    %1463 = vadd.xlane.f32.xlu0 %v1462
    %v1464 = vpop.xlane.xlu0 %1463
    %v1465 = vld [vmem:[#allocation2] sm:$0x1]
    %v1467 = vperm.slane %v1465, 0
    %v1469 = vadd.f32 %v1461, %v1467
    %v1470 = vadd.f32 %v1464, %v1467
    %v1471 = vpack.c.bf16 %v1390, %v1389
    %v1472 = vld [vmem:[#allocation5] sm:$0xf]
    %v1473 = vld [vmem:[#allocation5 + $0x4] sm:$0xf]
    %v1474 = vld [vmem:[#allocation5 + $0x8] sm:$0xf]
    %v1475 = vld [vmem:[#allocation5 + $0xc] sm:$0xf]
    %v1476 = vld [vmem:[#allocation5 + $0x10] sm:$0xf]
    %v1477 = vld [vmem:[#allocation5 + $0x14] sm:$0xf]
    %v1478 = vld [vmem:[#allocation5 + $0x18] sm:$0xf]
    %v1479 = vld [vmem:[#allocation5 + $0x1c] sm:$0xf]
    %v1480 = vld [vmem:[#allocation5 + $0x20] sm:$0xf]
    %v1481 = vld [vmem:[#allocation5 + $0x24] sm:$0xf]
    %v1482 = vld [vmem:[#allocation5 + $0x28] sm:$0xf]
    %v1483 = vld [vmem:[#allocation5 + $0x2c] sm:$0xf]
    %v1484 = vld [vmem:[#allocation5 + $0x30] sm:$0xf]
    %v1485 = vld [vmem:[#allocation5 + $0x34] sm:$0xf]
    %v1486 = vld [vmem:[#allocation5 + $0x38] sm:$0xf]
    %v1487 = vld [vmem:[#allocation5 + $0x3c] sm:$0xf]
    %v1488 = vld [vmem:[%s13] sm:$0x1]
    %v1490 = vperm.slane %v1488, 0
    %v1508 = vunpack.c.l.b16 %v1472
    %v1509 = vunpack.c.l.b16 %v1473
    %v1510 = vunpack.c.l.b16 %v1474
    %v1511 = vunpack.c.l.b16 %v1475
    %v1512 = vunpack.c.l.b16 %v1476
    %v1513 = vunpack.c.l.b16 %v1477
    %v1514 = vunpack.c.l.b16 %v1478
    %v1515 = vunpack.c.l.b16 %v1479
    %v1516 = vunpack.c.l.b16 %v1480
    %v1517 = vunpack.c.l.b16 %v1481
    %v1518 = vunpack.c.l.b16 %v1482
    %v1519 = vunpack.c.l.b16 %v1483
    %v1520 = vunpack.c.l.b16 %v1484
    %v1521 = vunpack.c.l.b16 %v1485
    %v1522 = vunpack.c.l.b16 %v1486
    %v1523 = vunpack.c.l.b16 %v1487
    %v1524 = vpack.c.b16 %v1509, %v1508
    %v1525 = vpack.c.b16 %v1511, %v1510
    %v1526 = vpack.c.b16 %v1513, %v1512
    %v1527 = vpack.c.b16 %v1515, %v1514
    %v1528 = vpack.c.b16 %v1517, %v1516
    %v1529 = vpack.c.b16 %v1519, %v1518
    %v1530 = vpack.c.b16 %v1521, %v1520
    %v1531 = vpack.c.b16 %v1523, %v1522
    %1540 = vmatpush.bf16.msra.mxu0 %v1531
    %1541 = vmatpush.bf16.msra.mxu0 %v1530
    %1542 = vmatpush.bf16.msra.mxu0 %v1529
    %1543 = vmatpush.bf16.msra.mxu0 %v1528
    %1544 = vmatpush.bf16.msra.mxu0 %v1527
    %1545 = vmatpush.bf16.msra.mxu0 %v1526
    %1546 = vmatpush.bf16.msra.mxu0 %v1525
    %1547 = vmatpush.bf16.msra.mxu0 %v1524
    %1548 = vmatmul.bf16.gmra.mxu0 %v1471
    %v1549 = vpop.f32.mrf.mxu0
    %v1550 = vadd.f32 %v1490, %v1549
    %v1551 = vpop.f32.mrf.mxu0
    %v1552 = vadd.f32 %v1490, %v1551
    %1553 = vdwg.mxu0
    %1554 = vadd.xlane.f32.xlu0 %v1550
    %v1555 = vpop.xlane.xlu0 %1554
    %1556 = vadd.xlane.f32.xlu0 %v1552
    %v1557 = vpop.xlane.xlu0 %1556
    %v1558 = vmul.f32 %v1555, 0.25
    %v1559 = vmul.f32 %v1557, 0.25
    %v1560 = vsub.f32 %v1550, %v1558
    %v1561 = vsub.f32 %v1552, %v1559
    %1563 = vset.pattern.permute.xlu0 0
    %1564 = vperm.xlu0 %1563, %v1469
    %v1565 = vpop.permute.xlu0 %1564
    %1568 = vset.pattern.permute.xlu0 0
    %1569 = vperm.xlu0 %1568, %v1470
    %v1570 = vpop.permute.xlu0 %1569
    %v1572 = vadd.f32 %v1565, %v1560
    %v1573 = vadd.f32 %v1570, %v1561
    %1574 = vst [vmem:[%s15] sm:$0xff] %v1572
    %1575 = vst [vmem:[%s15 + $0x8] sm:$0xff] %v1573
    // Predicated region
    $region70: #{dueling_dqn_forward.1} parent=1 // pred_check
      _
    $region71: #{dueling_dqn_forward.1} parent=1 // pred_check_branch
      %1577 = sbr.rel (0) target = $region73
    $region72: #{dueling_dqn_forward.1} parent=1 // pred_region
      _
    $region73: #{dueling_dqn_forward.1} parent=1 // pred_fallthru
      _
    // Predicated region
    $region74: #{dueling_dqn_forward.1} parent=1 // pred_check
      _
    $region75: #{dueling_dqn_forward.1} parent=1 // pred_check_branch
      %1579 = sbr.rel (0) target = $region77
    $region76: #{dueling_dqn_forward.1} parent=1 // pred_region
      _
    $region77: #{dueling_dqn_forward.1} parent=1 // pred_fallthru
      _
    %1580 = vsyncpa [#allocation4], 1
    %1581 = vsyncpa [#allocation6], 1

</llo_original>
